<compile_context>
chip_gen: v7x
topology: tpu7x:2x2x1
jax: 0.10.0
libtpu: 0.0.40
codegen_flags: <defaults>
</compile_context>

<pallas_src>
import math
import numpy as np

import jax
import jax.numpy as jnp
from jax.experimental import pallas as pl
from jax.experimental.pallas import tpu as pltpu


# -----------------------------------------------------------------------------
# Deterministic camera initialization (mirrors init_clustered_cameras /
# look_at_R / rotmat_to_axis_angle from the PyTorch module) -- host-side glue.
# -----------------------------------------------------------------------------
def _look_at_R(cam_pos: np.ndarray) -> np.ndarray:
    z_axis = cam_pos / np.linalg.norm(cam_pos)
    up_tmp = np.array([0.0, 1.0, 0.0], dtype=np.float64)
    if abs(np.dot(z_axis, up_tmp)) > 0.999:
        up_tmp = np.array([0.0, 0.0, 1.0], dtype=np.float64)
    x_axis = np.cross(up_tmp, z_axis)
    x_axis = x_axis / np.linalg.norm(x_axis)
    y_axis = np.cross(z_axis, x_axis)
    return np.stack([x_axis, y_axis, z_axis], axis=1)


def _rotmat_to_axis_angle(R: np.ndarray) -> np.ndarray:
    cos_theta = (np.trace(R) - 1.0) / 2.0
    cos_theta = np.clip(cos_theta, -1.0 + 1e-06, 1.0 - 1e-06)
    theta = np.arccos(cos_theta)
    axis = np.array(
        [R[2, 1] - R[1, 2], R[0, 2] - R[2, 0], R[1, 0] - R[0, 1]], dtype=np.float64
    ) / (2.0 * np.sin(theta))
    return axis * theta


def init_clustered_cameras(num_views: int, obj_radius: float = 1.0,
                           cam_distance: float = 0.001,
                           cluster_std_deg: float = 10.0):
    # TODO(synk): like the PyTorch reference, this always builds 8 cameras and
    # ignores num_views / cluster_std_deg; num_views != 8 is unsupported there too.
    phase_shift = math.pi / 16
    angle_step = 2 * math.pi / 8
    tilt = 0.1
    dirs = []
    for i in range(8):
        angle = i * angle_step + phase_shift
        vec = np.array([math.cos(angle), math.sin(angle), tilt], dtype=np.float64)
        dirs.append(vec / np.linalg.norm(vec))
    dirs = np.stack(dirs, axis=0)
    centres = dirs * cam_distance * obj_radius * 0.8
    rot_vecs = np.stack([_rotmat_to_axis_angle(_look_at_R(c)) for c in centres], axis=0)
    f_init = np.full((8,), 0.8, dtype=np.float64)
    return (rot_vecs.astype(np.float32),
            centres.astype(np.float32),
            f_init.astype(np.float32))


def so3_exponential_map(log_rotations: jnp.ndarray) -> jnp.ndarray:
    """Rodrigues' formula, identical to the PyTorch _so3_exponential_map."""
    K = log_rotations.shape[0]
    theta = jnp.clip(jnp.linalg.norm(log_rotations, axis=1, keepdims=True), 1e-08)
    k = log_rotations / theta
    kx, ky, kz = k[:, 0], k[:, 1], k[:, 2]
    zeros = jnp.zeros_like(kx)
    K_ss = jnp.stack(
        [jnp.stack([zeros, -kz, ky], axis=-1),
         jnp.stack([kz, zeros, -kx], axis=-1),
         jnp.stack([-ky, kx, zeros], axis=-1)],
        axis=1,
    )  # (K, 3, 3)
    I = jnp.broadcast_to(jnp.eye(3, dtype=log_rotations.dtype), (K, 3, 3))
    sin_t = jnp.sin(theta)[..., None]
    cos_t = jnp.cos(theta)[..., None]
    KK = jnp.matmul(K_ss, K_ss, precision=jax.lax.Precision.HIGHEST)
    return I + sin_t * K_ss + (1.0 - cos_t) * KK


# -----------------------------------------------------------------------------
# Pallas kernel: one grid step handles a (ts, 128) tile of points for ALL views.
#   params_ref : SMEM (K, 16) = [R(9), c=R@t (3), f*W/2, f*H/2, W/2, H/2]
#   pts_ref    : VMEM (1, 3, ts, 128)      xyz rows, points lane-dense
#   pix_ref    : VMEM (1, 2K, ts, 128)     rows (2k, 2k+1) = x_pix, y_pix of view k
#   z_ref      : VMEM (1, K,  ts, 128)     row k = z_cam of view k
# -----------------------------------------------------------------------------
def _make_project_kernel(num_views: int):
    K = num_views

    def kernel(params_ref, pts_ref, pix_ref, z_ref):
        px = pts_ref[0, 0]   # (ts, 128)
        py = pts_ref[0, 1]
        pz = pts_ref[0, 2]

        for k in range(K):   # static unrolled view loop; camera scalars from SMEM
            r00 = params_ref[k, 0]; r01 = params_ref[k, 1]; r02 = params_ref[k, 2]
            r10 = params_ref[k, 3]; r11 = params_ref[k, 4]; r12 = params_ref[k, 5]
            r20 = params_ref[k, 6]; r21 = params_ref[k, 7]; r22 = params_ref[k, 8]
            c0  = params_ref[k, 9]; c1  = params_ref[k, 10]; c2 = params_ref[k, 11]
            fw  = params_ref[k, 12]   # f * W / 2
            fh  = params_ref[k, 13]   # f * H / 2
            hw  = params_ref[k, 14]   # W / 2
            hh  = params_ref[k, 15]   # H / 2

            # R @ (p - t) == R @ p - (R @ t); translation folded into c host-side.
            xc = r00 * px + r01 * py + r02 * pz - c0
            yc = r10 * px + r11 * py + r12 * pz - c1
            zc = jnp.maximum(r20 * px + r21 * py + r22 * pz - c2,
                             jnp.float32(1e-05))

            # Exact reciprocal (approx=False) for parity with PyTorch's divide;
            # still on the EUP, off the VALU path.
            inv_z = pl.reciprocal(zc)

            pix_ref[0, 2 * k]     = fw * (xc * inv_z) + hw
            pix_ref[0, 2 * k + 1] = fh * (yc * inv_z) + hh
            z_ref[0, k]           = zc

    return kernel


class DifferentiableMultiViewProjectorPallas:
    LANE = 128
    TS_MAX = 256   # up to 256*128 = 32768 points / grid step (~7 MiB double-buffered)

    def __init__(self, num_views: int, image_height: int, image_width: int,
                 obj_radius: float = 0.9, cam_distance: float = 1.6,
                 cluster_std_deg: float = 50.0):
        if not isinstance(num_views, int) or num_views <= 0:
            raise ValueError("num_views must be a positive integer")
        if num_views != 8:
            # TODO(synk): camera init (like the PyTorch reference) hard-codes 8 views.
            raise ValueError("init_clustered_cameras builds exactly 8 cameras; "
                             "num_views must be 8")
        self.num_views = num_views
        self.image_height = image_height
        self.image_width = image_width
        rot_vecs, centres, f_init = init_clustered_cameras(
            num_views, obj_radius=obj_radius, cam_distance=cam_distance,
            cluster_std_deg=cluster_std_deg)
        self.rotation_vectors = jnp.asarray(rot_vecs)      # (8, 3)
        self.translations = jnp.asarray(centres)           # (8, 3)
        self.focal_lengths = jnp.asarray(f_init)           # (8,)
        # Single jitted forward: packing, pad/reshape, pallas_call and output
        # unpacking all fuse into one executable (no eager relayout round trips).
        self._forward = jax.jit(self._forward_impl)

    # ------------------------------------------------------------------ params
    def _packed_params(self, rot_vecs, translations, focal_lengths):
        """(K, 16): [R(9), c=R@t (3), f*W/2, f*H/2, W/2, H/2]."""
        K = self.num_views
        R = so3_exponential_map(rot_vecs.astype(jnp.float32))         # (K,3,3)
        # c = R @ t computed elementwise in f32 (avoid low-precision matmul path).
        c = jnp.sum(R * translations.astype(jnp.float32)[:, None, :], axis=-1)
        f = focal_lengths.astype(jnp.float32)
        fw = (f * (self.image_width / 2.0))[:, None]
        fh = (f * (self.image_height / 2.0))[:, None]
        hw = jnp.full((K, 1), self.image_width / 2.0, jnp.float32)
        hh = jnp.full((K, 1), self.image_height / 2.0, jnp.float32)
        return jnp.concatenate([R.reshape(K, 9), c, fw, fh, hw, hh],
                               axis=1).astype(jnp.float32)            # (K, 16)

    # ----------------------------------------------------------------- forward
    def _forward_impl(self, rot_vecs, translations, focal_lengths, points_world):
        B, N, _ = points_world.shape
        K = self.num_views
        LANE = self.LANE

        nt = pl.cdiv(N, LANE)          # rows of 128 points (Python int)
        N_pad = nt * LANE

        # Tile rows per grid step: as large as possible, ragged final block is
        # handled by Pallas (padded reads / masked stores), no rounding of nt
        # up to a multiple of ts.
        ts = nt if nt <= self.TS_MAX else self.TS_MAX
        if B * pl.cdiv(nt, ts) < 2 and nt > 8:
            # Keep >=2 grid steps so both TensorCores (v7x) get work.
            ts = -(-pl.cdiv(nt, 2) // 8) * 8
        n_tiles = pl.cdiv(nt, ts)

        # Lane-dense layout: (B, 3, nt, 128).
        pts = jnp.transpose(points_world.astype(jnp.float32), (0, 2, 1))  # (B,3,N)
        if N_pad != N:
            pts = jnp.pad(pts, ((0, 0), (0, 0), (0, N_pad - N)))
        pts = pts.reshape(B, 3, nt, LANE)

        params = self._packed_params(rot_vecs, translations, focal_lengths)  # (K,16)

        pix, zout = pl.pallas_call(
            _make_project_kernel(K),
            out_shape=(
                jax.ShapeDtypeStruct((B, 2 * K, nt, LANE), jnp.float32),
                jax.ShapeDtypeStruct((B, K, nt, LANE), jnp.float32),
            ),
            grid=(B, n_tiles),
            in_specs=[
                pl.BlockSpec(memory_space=pltpu.MemorySpace.SMEM),
                pl.BlockSpec((1, 3, ts, LANE), lambda b, n: (b, 0, n, 0)),
            ],
            out_specs=(
                pl.BlockSpec((1, 2 * K, ts, LANE), lambda b, n: (b, 0, n, 0)),
                pl.BlockSpec((1, K, ts, LANE), lambda b, n: (b, 0, n, 0)),
            ),
            compiler_params=pltpu.CompilerParams(
                dimension_semantics=("parallel", "parallel")),
        )(params, pts)

        # Pure reshapes (no strided slice) + one small transpose to (B,K,N,2).
        pix = pix.reshape(B, K, 2, N_pad)[:, :, :, :N]       # (B,K,2,N)
        projected_pixels = jnp.transpose(pix, (0, 1, 3, 2))  # (B,K,N,2)
        z_cam = zout.reshape(B, K, N_pad)[:, :, :N]          # (B,K,N)
        return projected_pixels, z_cam

    def __call__(self, points_world: jnp.ndarray):
        return self._forward(self.rotation_vectors, self.translations,
                             self.focal_lengths, points_world)

    # pure-JAX reference (same math as the PyTorch forward), for verification
    def reference(self, points_world: jnp.ndarray):
        R = so3_exponential_map(self.rotation_vectors)             # (K,3,3)
        p = points_world[:, None, :, :]                            # (B,1,N,3)
        t = self.translations[None, :, None, :]                    # (1,K,1,3)
        d = p - t                                                  # (B,K,N,3)
        pc = jnp.einsum("kij,bknj->bkni", R, d,
                        precision=jax.lax.Precision.HIGHEST)       # (B,K,N,3)
        x_cam, y_cam = pc[..., 0], pc[..., 1]
        z_cam = jnp.maximum(pc[..., 2], 1e-05)
        f = self.focal_lengths[None, :, None]
        x_pix = f * (x_cam / z_cam) * (self.image_width / 2.0) + self.image_width / 2.0
        y_pix = f * (y_cam / z_cam) * (self.image_height / 2.0) + self.image_height / 2.0
        return jnp.stack([x_pix, y_pix], axis=-1), z_cam


def _check(pix, z, pix_ref, z_ref):
    pix_np, z_np = np.asarray(pix), np.asarray(z)
    pix_r, z_r = np.asarray(pix_ref), np.asarray(z_ref)
    # Points behind a camera get z clamped to 1e-5 (as in PyTorch); ULP-level f32
    # rounding differences in x_cam/y_cam are then amplified by 1/z * f * W/2, so
    # the meaningful absolute noise floor is ~1e-5 of the pixel dynamic range.
    atol_pix = max(1e-2, 1e-5 * float(np.max(np.abs(pix_r))))
    np.testing.assert_allclose(pix_np, pix_r, rtol=1e-3, atol=atol_pix)
    np.testing.assert_allclose(z_np, z_r, rtol=1e-3, atol=1e-5)


if __name__ == "__main__":
    H, W = 64, 64
    num_views = 8
    projector = DifferentiableMultiViewProjectorPallas(
        num_views=num_views, image_height=H, image_width=W)

    key = jax.random.PRNGKey(0)
    k1, k2, k3 = jax.random.split(key, 3)

    # Case 1: small cloud (single tile per batch element).
    B, N_pts = 2, 200
    pw_small = 0.3 * jax.random.normal(k1, (B, N_pts, 3), dtype=jnp.float32)
    pix, z = projector(pw_small)
    pix, z = jax.block_until_ready(pix), jax.block_until_ready(z)
    _check(pix, z, *projector.reference(pw_small))
    assert pix.shape == (B, num_views, N_pts, 2)
    assert z.shape == (B, num_views, N_pts)

    # Case 2: larger cloud (padding to a multiple of 128, still one tile/batch).
    B2, N2 = 2, 9000
    pw_big = 0.3 * jax.random.normal(k2, (B2, N2, 3), dtype=jnp.float32)
    pix2, z2 = projector(pw_big)
    pix2, z2 = jax.block_until_ready(pix2), jax.block_until_ready(z2)
    _check(pix2, z2, *projector.reference(pw_big))
    assert pix2.shape == (B2, num_views, N2, 2)
    assert z2.shape == (B2, num_views, N2)

    # Case 3: force the multi-tile path with a ragged final block at small scale
    # (nt=20 rows, tiles of 8 rows -> last block covers only 4 valid rows).
    projector.TS_MAX = 8
    B3, N3 = 1, 2500
    pw_rag = 0.3 * jax.random.normal(k3, (B3, N3, 3), dtype=jnp.float32)
    pix3, z3 = projector(pw_rag)
    pix3, z3 = jax.block_until_ready(pix3), jax.block_until_ready(z3)
    _check(pix3, z3, *projector.reference(pw_rag))
    assert pix3.shape == (B3, num_views, N3, 2)
    assert z3.shape == (B3, num_views, N3)

    print("KERNEL_OK")
</pallas_src>

<mosaic_0001>
module attributes {stable_mosaic.version = 11 : i64} {
  func.func @kernel(%arg0: i32, %arg1: i32, %arg2: memref<8x16xf32, #tpu.memory_space<smem>>, %arg3: memref<1x3x2x128xf32, #tpu.memory_space<vmem>>, %arg4: memref<1x16x2x128xf32, #tpu.memory_space<vmem>>, %arg5: memref<1x8x2x128xf32, #tpu.memory_space<vmem>>) attributes {dimension_semantics = [#tpu.dimension_semantics<parallel>, #tpu.dimension_semantics<parallel>], iteration_bounds = array<i64: 2, 1>, scalar_prefetch = 0 : i64, scratch_operands = 0 : i64, tpu.core_type = #tpu.core_type<tc>, window_params = [{transform_indices = @transform_0, window_bounds = array<i64: 8, 16>}, {transform_indices = @transform_1, window_bounds = array<i64: 1, 3, 2, 128>}, {transform_indices = @transform_2, window_bounds = array<i64: 1, 16, 2, 128>}, {transform_indices = @transform_3, window_bounds = array<i64: 1, 8, 2, 128>}]} {
    %c0 = arith.constant 0 : index
    %c0_0 = arith.constant 0 : index
    %c0_1 = arith.constant 0 : index
    %c0_2 = arith.constant 0 : index
    %0 = vector.load %arg3[%c0, %c0_0, %c0_1, %c0_2] : memref<1x3x2x128xf32, #tpu.memory_space<vmem>>, vector<1x1x2x128xf32>
    %1 = vector.shape_cast %0 : vector<1x1x2x128xf32> to vector<2x128xf32>
    %c0_3 = arith.constant 0 : index
    %c1 = arith.constant 1 : index
    %c0_4 = arith.constant 0 : index
    %c0_5 = arith.constant 0 : index
    %2 = vector.load %arg3[%c0_3, %c1, %c0_4, %c0_5] : memref<1x3x2x128xf32, #tpu.memory_space<vmem>>, vector<1x1x2x128xf32>
    %3 = vector.shape_cast %2 : vector<1x1x2x128xf32> to vector<2x128xf32>
    %c0_6 = arith.constant 0 : index
    %c2 = arith.constant 2 : index
    %c0_7 = arith.constant 0 : index
    %c0_8 = arith.constant 0 : index
    %4 = vector.load %arg3[%c0_6, %c2, %c0_7, %c0_8] : memref<1x3x2x128xf32, #tpu.memory_space<vmem>>, vector<1x1x2x128xf32>
    %5 = vector.shape_cast %4 : vector<1x1x2x128xf32> to vector<2x128xf32>
    %c0_9 = arith.constant 0 : index
    %c0_10 = arith.constant 0 : index
    %6 = memref.load %arg2[%c0_9, %c0_10] : memref<8x16xf32, #tpu.memory_space<smem>>
    %c0_11 = arith.constant 0 : index
    %c1_12 = arith.constant 1 : index
    %7 = memref.load %arg2[%c0_11, %c1_12] : memref<8x16xf32, #tpu.memory_space<smem>>
    %c0_13 = arith.constant 0 : index
    %c2_14 = arith.constant 2 : index
    %8 = memref.load %arg2[%c0_13, %c2_14] : memref<8x16xf32, #tpu.memory_space<smem>>
    %c0_15 = arith.constant 0 : index
    %c3 = arith.constant 3 : index
    %9 = memref.load %arg2[%c0_15, %c3] : memref<8x16xf32, #tpu.memory_space<smem>>
    %c0_16 = arith.constant 0 : index
    %c4 = arith.constant 4 : index
    %10 = memref.load %arg2[%c0_16, %c4] : memref<8x16xf32, #tpu.memory_space<smem>>
    %c0_17 = arith.constant 0 : index
    %c5 = arith.constant 5 : index
    %11 = memref.load %arg2[%c0_17, %c5] : memref<8x16xf32, #tpu.memory_space<smem>>
    %c0_18 = arith.constant 0 : index
    %c6 = arith.constant 6 : index
    %12 = memref.load %arg2[%c0_18, %c6] : memref<8x16xf32, #tpu.memory_space<smem>>
    %c0_19 = arith.constant 0 : index
    %c7 = arith.constant 7 : index
    %13 = memref.load %arg2[%c0_19, %c7] : memref<8x16xf32, #tpu.memory_space<smem>>
    %c0_20 = arith.constant 0 : index
    %c8 = arith.constant 8 : index
    %14 = memref.load %arg2[%c0_20, %c8] : memref<8x16xf32, #tpu.memory_space<smem>>
    %c0_21 = arith.constant 0 : index
    %c9 = arith.constant 9 : index
    %15 = memref.load %arg2[%c0_21, %c9] : memref<8x16xf32, #tpu.memory_space<smem>>
    %c0_22 = arith.constant 0 : index
    %c10 = arith.constant 10 : index
    %16 = memref.load %arg2[%c0_22, %c10] : memref<8x16xf32, #tpu.memory_space<smem>>
    %c0_23 = arith.constant 0 : index
    %c11 = arith.constant 11 : index
    %17 = memref.load %arg2[%c0_23, %c11] : memref<8x16xf32, #tpu.memory_space<smem>>
    %c0_24 = arith.constant 0 : index
    %c12 = arith.constant 12 : index
    %18 = memref.load %arg2[%c0_24, %c12] : memref<8x16xf32, #tpu.memory_space<smem>>
    %c0_25 = arith.constant 0 : index
    %c13 = arith.constant 13 : index
    %19 = memref.load %arg2[%c0_25, %c13] : memref<8x16xf32, #tpu.memory_space<smem>>
    %c0_26 = arith.constant 0 : index
    %c14 = arith.constant 14 : index
    %20 = memref.load %arg2[%c0_26, %c14] : memref<8x16xf32, #tpu.memory_space<smem>>
    %c0_27 = arith.constant 0 : index
    %c15 = arith.constant 15 : index
    %21 = memref.load %arg2[%c0_27, %c15] : memref<8x16xf32, #tpu.memory_space<smem>>
    %22 = vector.broadcast %6 : f32 to vector<2x128xf32>
    %23 = arith.mulf %22, %1 : vector<2x128xf32>
    %24 = vector.broadcast %7 : f32 to vector<2x128xf32>
    %25 = arith.mulf %24, %3 : vector<2x128xf32>
    %26 = arith.addf %23, %25 : vector<2x128xf32>
    %27 = vector.broadcast %8 : f32 to vector<2x128xf32>
    %28 = arith.mulf %27, %5 : vector<2x128xf32>
    %29 = arith.addf %26, %28 : vector<2x128xf32>
    %30 = vector.broadcast %15 : f32 to vector<2x128xf32>
    %31 = arith.subf %29, %30 : vector<2x128xf32>
    %32 = vector.broadcast %9 : f32 to vector<2x128xf32>
    %33 = arith.mulf %32, %1 : vector<2x128xf32>
    %34 = vector.broadcast %10 : f32 to vector<2x128xf32>
    %35 = arith.mulf %34, %3 : vector<2x128xf32>
    %36 = arith.addf %33, %35 : vector<2x128xf32>
    %37 = vector.broadcast %11 : f32 to vector<2x128xf32>
    %38 = arith.mulf %37, %5 : vector<2x128xf32>
    %39 = arith.addf %36, %38 : vector<2x128xf32>
    %40 = vector.broadcast %16 : f32 to vector<2x128xf32>
    %41 = arith.subf %39, %40 : vector<2x128xf32>
    %42 = vector.broadcast %12 : f32 to vector<2x128xf32>
    %43 = arith.mulf %42, %1 : vector<2x128xf32>
    %44 = vector.broadcast %13 : f32 to vector<2x128xf32>
    %45 = arith.mulf %44, %3 : vector<2x128xf32>
    %46 = arith.addf %43, %45 : vector<2x128xf32>
    %47 = vector.broadcast %14 : f32 to vector<2x128xf32>
    %48 = arith.mulf %47, %5 : vector<2x128xf32>
    %49 = arith.addf %46, %48 : vector<2x128xf32>
    %50 = vector.broadcast %17 : f32 to vector<2x128xf32>
    %51 = arith.subf %49, %50 : vector<2x128xf32>
    %cst = arith.constant 9.99999974E-6 : f32
    %52 = vector.broadcast %cst : f32 to vector<2x128xf32>
    %53 = arith.maximumf %51, %52 : vector<2x128xf32>
    %54 = tpu.reciprocal %53 : vector<2x128xf32> -> vector<2x128xf32>
    %55 = arith.mulf %31, %54 : vector<2x128xf32>
    %56 = vector.broadcast %18 : f32 to vector<2x128xf32>
    %57 = arith.mulf %56, %55 : vector<2x128xf32>
    %58 = vector.broadcast %20 : f32 to vector<2x128xf32>
    %59 = arith.addf %57, %58 : vector<2x128xf32>
    %c0_28 = arith.constant 0 : index
    %c0_29 = arith.constant 0 : index
    %c0_30 = arith.constant 0 : index
    %c0_31 = arith.constant 0 : index
    %60 = vector.load %arg4[%c0_28, %c0_29, %c0_30, %c0_31] : memref<1x16x2x128xf32, #tpu.memory_space<vmem>>, vector<1x1x2x128xf32>
    %61 = vector.shape_cast %60 : vector<1x1x2x128xf32> to vector<2x128xf32>
    %62 = vector.shape_cast %59 : vector<2x128xf32> to vector<1x1x2x128xf32>
    tpu.vector_store %arg4[%c0_28, %c0_29, %c0_30, %c0_31], %62 {strides = array<i32>} : memref<1x16x2x128xf32, #tpu.memory_space<vmem>>, vector<1x1x2x128xf32>,
    %63 = arith.mulf %41, %54 : vector<2x128xf32>
    %64 = vector.broadcast %19 : f32 to vector<2x128xf32>
    %65 = arith.mulf %64, %63 : vector<2x128xf32>
    %66 = vector.broadcast %21 : f32 to vector<2x128xf32>
    %67 = arith.addf %65, %66 : vector<2x128xf32>
    %c0_32 = arith.constant 0 : index
    %c1_33 = arith.constant 1 : index
    %c0_34 = arith.constant 0 : index
    %c0_35 = arith.constant 0 : index
    %68 = vector.load %arg4[%c0_32, %c1_33, %c0_34, %c0_35] : memref<1x16x2x128xf32, #tpu.memory_space<vmem>>, vector<1x1x2x128xf32>
    %69 = vector.shape_cast %68 : vector<1x1x2x128xf32> to vector<2x128xf32>
    %70 = vector.shape_cast %67 : vector<2x128xf32> to vector<1x1x2x128xf32>
    tpu.vector_store %arg4[%c0_32, %c1_33, %c0_34, %c0_35], %70 {strides = array<i32>} : memref<1x16x2x128xf32, #tpu.memory_space<vmem>>, vector<1x1x2x128xf32>,
    %c0_36 = arith.constant 0 : index
    %c0_37 = arith.constant 0 : index
    %c0_38 = arith.constant 0 : index
    %c0_39 = arith.constant 0 : index
    %71 = vector.load %arg5[%c0_36, %c0_37, %c0_38, %c0_39] : memref<1x8x2x128xf32, #tpu.memory_space<vmem>>, vector<1x1x2x128xf32>
    %72 = vector.shape_cast %71 : vector<1x1x2x128xf32> to vector<2x128xf32>
    %73 = vector.shape_cast %53 : vector<2x128xf32> to vector<1x1x2x128xf32>
    tpu.vector_store %arg5[%c0_36, %c0_37, %c0_38, %c0_39], %73 {strides = array<i32>} : memref<1x8x2x128xf32, #tpu.memory_space<vmem>>, vector<1x1x2x128xf32>,
    %c1_40 = arith.constant 1 : index
    %c0_41 = arith.constant 0 : index
    %74 = memref.load %arg2[%c1_40, %c0_41] : memref<8x16xf32, #tpu.memory_space<smem>>
    %c1_42 = arith.constant 1 : index
    %c1_43 = arith.constant 1 : index
    %75 = memref.load %arg2[%c1_42, %c1_43] : memref<8x16xf32, #tpu.memory_space<smem>>
    %c1_44 = arith.constant 1 : index
    %c2_45 = arith.constant 2 : index
    %76 = memref.load %arg2[%c1_44, %c2_45] : memref<8x16xf32, #tpu.memory_space<smem>>
    %c1_46 = arith.constant 1 : index
    %c3_47 = arith.constant 3 : index
    %77 = memref.load %arg2[%c1_46, %c3_47] : memref<8x16xf32, #tpu.memory_space<smem>>
    %c1_48 = arith.constant 1 : index
    %c4_49 = arith.constant 4 : index
    %78 = memref.load %arg2[%c1_48, %c4_49] : memref<8x16xf32, #tpu.memory_space<smem>>
    %c1_50 = arith.constant 1 : index
    %c5_51 = arith.constant 5 : index
    %79 = memref.load %arg2[%c1_50, %c5_51] : memref<8x16xf32, #tpu.memory_space<smem>>
    %c1_52 = arith.constant 1 : index
    %c6_53 = arith.constant 6 : index
    %80 = memref.load %arg2[%c1_52, %c6_53] : memref<8x16xf32, #tpu.memory_space<smem>>
    %c1_54 = arith.constant 1 : index
    %c7_55 = arith.constant 7 : index
    %81 = memref.load %arg2[%c1_54, %c7_55] : memref<8x16xf32, #tpu.memory_space<smem>>
    %c1_56 = arith.constant 1 : index
    %c8_57 = arith.constant 8 : index
    %82 = memref.load %arg2[%c1_56, %c8_57] : memref<8x16xf32, #tpu.memory_space<smem>>
    %c1_58 = arith.constant 1 : index
    %c9_59 = arith.constant 9 : index
    %83 = memref.load %arg2[%c1_58, %c9_59] : memref<8x16xf32, #tpu.memory_space<smem>>
    %c1_60 = arith.constant 1 : index
    %c10_61 = arith.constant 10 : index
    %84 = memref.load %arg2[%c1_60, %c10_61] : memref<8x16xf32, #tpu.memory_space<smem>>
    %c1_62 = arith.constant 1 : index
    %c11_63 = arith.constant 11 : index
    %85 = memref.load %arg2[%c1_62, %c11_63] : memref<8x16xf32, #tpu.memory_space<smem>>
    %c1_64 = arith.constant 1 : index
    %c12_65 = arith.constant 12 : index
    %86 = memref.load %arg2[%c1_64, %c12_65] : memref<8x16xf32, #tpu.memory_space<smem>>
    %c1_66 = arith.constant 1 : index
    %c13_67 = arith.constant 13 : index
    %87 = memref.load %arg2[%c1_66, %c13_67] : memref<8x16xf32, #tpu.memory_space<smem>>
    %c1_68 = arith.constant 1 : index
    %c14_69 = arith.constant 14 : index
    %88 = memref.load %arg2[%c1_68, %c14_69] : memref<8x16xf32, #tpu.memory_space<smem>>
    %c1_70 = arith.constant 1 : index
    %c15_71 = arith.constant 15 : index
    %89 = memref.load %arg2[%c1_70, %c15_71] : memref<8x16xf32, #tpu.memory_space<smem>>
    %90 = vector.broadcast %74 : f32 to vector<2x128xf32>
    %91 = arith.mulf %90, %1 : vector<2x128xf32>
    %92 = vector.broadcast %75 : f32 to vector<2x128xf32>
    %93 = arith.mulf %92, %3 : vector<2x128xf32>
    %94 = arith.addf %91, %93 : vector<2x128xf32>
    %95 = vector.broadcast %76 : f32 to vector<2x128xf32>
    %96 = arith.mulf %95, %5 : vector<2x128xf32>
    %97 = arith.addf %94, %96 : vector<2x128xf32>
    %98 = vector.broadcast %83 : f32 to vector<2x128xf32>
    %99 = arith.subf %97, %98 : vector<2x128xf32>
    %100 = vector.broadcast %77 : f32 to vector<2x128xf32>
    %101 = arith.mulf %100, %1 : vector<2x128xf32>
    %102 = vector.broadcast %78 : f32 to vector<2x128xf32>
    %103 = arith.mulf %102, %3 : vector<2x128xf32>
    %104 = arith.addf %101, %103 : vector<2x128xf32>
    %105 = vector.broadcast %79 : f32 to vector<2x128xf32>
    %106 = arith.mulf %105, %5 : vector<2x128xf32>
    %107 = arith.addf %104, %106 : vector<2x128xf32>
    %108 = vector.broadcast %84 : f32 to vector<2x128xf32>
    %109 = arith.subf %107, %108 : vector<2x128xf32>
    %110 = vector.broadcast %80 : f32 to vector<2x128xf32>
    %111 = arith.mulf %110, %1 : vector<2x128xf32>
    %112 = vector.broadcast %81 : f32 to vector<2x128xf32>
    %113 = arith.mulf %112, %3 : vector<2x128xf32>
    %114 = arith.addf %111, %113 : vector<2x128xf32>
    %115 = vector.broadcast %82 : f32 to vector<2x128xf32>
    %116 = arith.mulf %115, %5 : vector<2x128xf32>
    %117 = arith.addf %114, %116 : vector<2x128xf32>
    %118 = vector.broadcast %85 : f32 to vector<2x128xf32>
    %119 = arith.subf %117, %118 : vector<2x128xf32>
    %cst_72 = arith.constant 9.99999974E-6 : f32
    %120 = vector.broadcast %cst_72 : f32 to vector<2x128xf32>
    %121 = arith.maximumf %119, %120 : vector<2x128xf32>
    %122 = tpu.reciprocal %121 : vector<2x128xf32> -> vector<2x128xf32>
    %123 = arith.mulf %99, %122 : vector<2x128xf32>
    %124 = vector.broadcast %86 : f32 to vector<2x128xf32>
    %125 = arith.mulf %124, %123 : vector<2x128xf32>
    %126 = vector.broadcast %88 : f32 to vector<2x128xf32>
    %127 = arith.addf %125, %126 : vector<2x128xf32>
    %c0_73 = arith.constant 0 : index
    %c2_74 = arith.constant 2 : index
    %c0_75 = arith.constant 0 : index
    %c0_76 = arith.constant 0 : index
    %128 = vector.load %arg4[%c0_73, %c2_74, %c0_75, %c0_76] : memref<1x16x2x128xf32, #tpu.memory_space<vmem>>, vector<1x1x2x128xf32>
    %129 = vector.shape_cast %128 : vector<1x1x2x128xf32> to vector<2x128xf32>
    %130 = vector.shape_cast %127 : vector<2x128xf32> to vector<1x1x2x128xf32>
    tpu.vector_store %arg4[%c0_73, %c2_74, %c0_75, %c0_76], %130 {strides = array<i32>} : memref<1x16x2x128xf32, #tpu.memory_space<vmem>>, vector<1x1x2x128xf32>,
    %131 = arith.mulf %109, %122 : vector<2x128xf32>
    %132 = vector.broadcast %87 : f32 to vector<2x128xf32>
    %133 = arith.mulf %132, %131 : vector<2x128xf32>
    %134 = vector.broadcast %89 : f32 to vector<2x128xf32>
    %135 = arith.addf %133, %134 : vector<2x128xf32>
    %c0_77 = arith.constant 0 : index
    %c3_78 = arith.constant 3 : index
    %c0_79 = arith.constant 0 : index
    %c0_80 = arith.constant 0 : index
    %136 = vector.load %arg4[%c0_77, %c3_78, %c0_79, %c0_80] : memref<1x16x2x128xf32, #tpu.memory_space<vmem>>, vector<1x1x2x128xf32>
    %137 = vector.shape_cast %136 : vector<1x1x2x128xf32> to vector<2x128xf32>
    %138 = vector.shape_cast %135 : vector<2x128xf32> to vector<1x1x2x128xf32>
    tpu.vector_store %arg4[%c0_77, %c3_78, %c0_79, %c0_80], %138 {strides = array<i32>} : memref<1x16x2x128xf32, #tpu.memory_space<vmem>>, vector<1x1x2x128xf32>,
    %c0_81 = arith.constant 0 : index
    %c1_82 = arith.constant 1 : index
    %c0_83 = arith.constant 0 : index
    %c0_84 = arith.constant 0 : index
    %139 = vector.load %arg5[%c0_81, %c1_82, %c0_83, %c0_84] : memref<1x8x2x128xf32, #tpu.memory_space<vmem>>, vector<1x1x2x128xf32>
    %140 = vector.shape_cast %139 : vector<1x1x2x128xf32> to vector<2x128xf32>
    %141 = vector.shape_cast %121 : vector<2x128xf32> to vector<1x1x2x128xf32>
    tpu.vector_store %arg5[%c0_81, %c1_82, %c0_83, %c0_84], %141 {strides = array<i32>} : memref<1x8x2x128xf32, #tpu.memory_space<vmem>>, vector<1x1x2x128xf32>,
    %c2_85 = arith.constant 2 : index
    %c0_86 = arith.constant 0 : index
    %142 = memref.load %arg2[%c2_85, %c0_86] : memref<8x16xf32, #tpu.memory_space<smem>>
    %c2_87 = arith.constant 2 : index
    %c1_88 = arith.constant 1 : index
    %143 = memref.load %arg2[%c2_87, %c1_88] : memref<8x16xf32, #tpu.memory_space<smem>>
    %c2_89 = arith.constant 2 : index
    %c2_90 = arith.constant 2 : index
    %144 = memref.load %arg2[%c2_89, %c2_90] : memref<8x16xf32, #tpu.memory_space<smem>>
    %c2_91 = arith.constant 2 : index
    %c3_92 = arith.constant 3 : index
    %145 = memref.load %arg2[%c2_91, %c3_92] : memref<8x16xf32, #tpu.memory_space<smem>>
    %c2_93 = arith.constant 2 : index
    %c4_94 = arith.constant 4 : index
    %146 = memref.load %arg2[%c2_93, %c4_94] : memref<8x16xf32, #tpu.memory_space<smem>>
    %c2_95 = arith.constant 2 : index
    %c5_96 = arith.constant 5 : index
    %147 = memref.load %arg2[%c2_95, %c5_96] : memref<8x16xf32, #tpu.memory_space<smem>>
    %c2_97 = arith.constant 2 : index
    %c6_98 = arith.constant 6 : index
    %148 = memref.load %arg2[%c2_97, %c6_98] : memref<8x16xf32, #tpu.memory_space<smem>>
    %c2_99 = arith.constant 2 : index
    %c7_100 = arith.constant 7 : index
    %149 = memref.load %arg2[%c2_99, %c7_100] : memref<8x16xf32, #tpu.memory_space<smem>>
    %c2_101 = arith.constant 2 : index
    %c8_102 = arith.constant 8 : index
    %150 = memref.load %arg2[%c2_101, %c8_102] : memref<8x16xf32, #tpu.memory_space<smem>>
    %c2_103 = arith.constant 2 : index
    %c9_104 = arith.constant 9 : index
    %151 = memref.load %arg2[%c2_103, %c9_104] : memref<8x16xf32, #tpu.memory_space<smem>>
    %c2_105 = arith.constant 2 : index
    %c10_106 = arith.constant 10 : index
    %152 = memref.load %arg2[%c2_105, %c10_106] : memref<8x16xf32, #tpu.memory_space<smem>>
    %c2_107 = arith.constant 2 : index
    %c11_108 = arith.constant 11 : index
    %153 = memref.load %arg2[%c2_107, %c11_108] : memref<8x16xf32, #tpu.memory_space<smem>>
    %c2_109 = arith.constant 2 : index
    %c12_110 = arith.constant 12 : index
    %154 = memref.load %arg2[%c2_109, %c12_110] : memref<8x16xf32, #tpu.memory_space<smem>>
    %c2_111 = arith.constant 2 : index
    %c13_112 = arith.constant 13 : index
    %155 = memref.load %arg2[%c2_111, %c13_112] : memref<8x16xf32, #tpu.memory_space<smem>>
    %c2_113 = arith.constant 2 : index
    %c14_114 = arith.constant 14 : index
    %156 = memref.load %arg2[%c2_113, %c14_114] : memref<8x16xf32, #tpu.memory_space<smem>>
    %c2_115 = arith.constant 2 : index
    %c15_116 = arith.constant 15 : index
    %157 = memref.load %arg2[%c2_115, %c15_116] : memref<8x16xf32, #tpu.memory_space<smem>>
    %158 = vector.broadcast %142 : f32 to vector<2x128xf32>
    %159 = arith.mulf %158, %1 : vector<2x128xf32>
    %160 = vector.broadcast %143 : f32 to vector<2x128xf32>
    %161 = arith.mulf %160, %3 : vector<2x128xf32>
    %162 = arith.addf %159, %161 : vector<2x128xf32>
    %163 = vector.broadcast %144 : f32 to vector<2x128xf32>
    %164 = arith.mulf %163, %5 : vector<2x128xf32>
    %165 = arith.addf %162, %164 : vector<2x128xf32>
    %166 = vector.broadcast %151 : f32 to vector<2x128xf32>
    %167 = arith.subf %165, %166 : vector<2x128xf32>
    %168 = vector.broadcast %145 : f32 to vector<2x128xf32>
    %169 = arith.mulf %168, %1 : vector<2x128xf32>
    %170 = vector.broadcast %146 : f32 to vector<2x128xf32>
    %171 = arith.mulf %170, %3 : vector<2x128xf32>
    %172 = arith.addf %169, %171 : vector<2x128xf32>
    %173 = vector.broadcast %147 : f32 to vector<2x128xf32>
    %174 = arith.mulf %173, %5 : vector<2x128xf32>
    %175 = arith.addf %172, %174 : vector<2x128xf32>
    %176 = vector.broadcast %152 : f32 to vector<2x128xf32>
    %177 = arith.subf %175, %176 : vector<2x128xf32>
    %178 = vector.broadcast %148 : f32 to vector<2x128xf32>
    %179 = arith.mulf %178, %1 : vector<2x128xf32>
    %180 = vector.broadcast %149 : f32 to vector<2x128xf32>
    %181 = arith.mulf %180, %3 : vector<2x128xf32>
    %182 = arith.addf %179, %181 : vector<2x128xf32>
    %183 = vector.broadcast %150 : f32 to vector<2x128xf32>
    %184 = arith.mulf %183, %5 : vector<2x128xf32>
    %185 = arith.addf %182, %184 : vector<2x128xf32>
    %186 = vector.broadcast %153 : f32 to vector<2x128xf32>
    %187 = arith.subf %185, %186 : vector<2x128xf32>
    %cst_117 = arith.constant 9.99999974E-6 : f32
    %188 = vector.broadcast %cst_117 : f32 to vector<2x128xf32>
    %189 = arith.maximumf %187, %188 : vector<2x128xf32>
    %190 = tpu.reciprocal %189 : vector<2x128xf32> -> vector<2x128xf32>
    %191 = arith.mulf %167, %190 : vector<2x128xf32>
    %192 = vector.broadcast %154 : f32 to vector<2x128xf32>
    %193 = arith.mulf %192, %191 : vector<2x128xf32>
    %194 = vector.broadcast %156 : f32 to vector<2x128xf32>
    %195 = arith.addf %193, %194 : vector<2x128xf32>
    %c0_118 = arith.constant 0 : index
    %c4_119 = arith.constant 4 : index
    %c0_120 = arith.constant 0 : index
    %c0_121 = arith.constant 0 : index
    %196 = vector.load %arg4[%c0_118, %c4_119, %c0_120, %c0_121] : memref<1x16x2x128xf32, #tpu.memory_space<vmem>>, vector<1x1x2x128xf32>
    %197 = vector.shape_cast %196 : vector<1x1x2x128xf32> to vector<2x128xf32>
    %198 = vector.shape_cast %195 : vector<2x128xf32> to vector<1x1x2x128xf32>
    tpu.vector_store %arg4[%c0_118, %c4_119, %c0_120, %c0_121], %198 {strides = array<i32>} : memref<1x16x2x128xf32, #tpu.memory_space<vmem>>, vector<1x1x2x128xf32>,
    %199 = arith.mulf %177, %190 : vector<2x128xf32>
    %200 = vector.broadcast %155 : f32 to vector<2x128xf32>
    %201 = arith.mulf %200, %199 : vector<2x128xf32>
    %202 = vector.broadcast %157 : f32 to vector<2x128xf32>
    %203 = arith.addf %201, %202 : vector<2x128xf32>
    %c0_122 = arith.constant 0 : index
    %c5_123 = arith.constant 5 : index
    %c0_124 = arith.constant 0 : index
    %c0_125 = arith.constant 0 : index
    %204 = vector.load %arg4[%c0_122, %c5_123, %c0_124, %c0_125] : memref<1x16x2x128xf32, #tpu.memory_space<vmem>>, vector<1x1x2x128xf32>
    %205 = vector.shape_cast %204 : vector<1x1x2x128xf32> to vector<2x128xf32>
    %206 = vector.shape_cast %203 : vector<2x128xf32> to vector<1x1x2x128xf32>
    tpu.vector_store %arg4[%c0_122, %c5_123, %c0_124, %c0_125], %206 {strides = array<i32>} : memref<1x16x2x128xf32, #tpu.memory_space<vmem>>, vector<1x1x2x128xf32>,
    %c0_126 = arith.constant 0 : index
    %c2_127 = arith.constant 2 : index
    %c0_128 = arith.constant 0 : index
    %c0_129 = arith.constant 0 : index
    %207 = vector.load %arg5[%c0_126, %c2_127, %c0_128, %c0_129] : memref<1x8x2x128xf32, #tpu.memory_space<vmem>>, vector<1x1x2x128xf32>
    %208 = vector.shape_cast %207 : vector<1x1x2x128xf32> to vector<2x128xf32>
    %209 = vector.shape_cast %189 : vector<2x128xf32> to vector<1x1x2x128xf32>
    tpu.vector_store %arg5[%c0_126, %c2_127, %c0_128, %c0_129], %209 {strides = array<i32>} : memref<1x8x2x128xf32, #tpu.memory_space<vmem>>, vector<1x1x2x128xf32>,
    %c3_130 = arith.constant 3 : index
    %c0_131 = arith.constant 0 : index
    %210 = memref.load %arg2[%c3_130, %c0_131] : memref<8x16xf32, #tpu.memory_space<smem>>
    %c3_132 = arith.constant 3 : index
    %c1_133 = arith.constant 1 : index
    %211 = memref.load %arg2[%c3_132, %c1_133] : memref<8x16xf32, #tpu.memory_space<smem>>
    %c3_134 = arith.constant 3 : index
    %c2_135 = arith.constant 2 : index
    %212 = memref.load %arg2[%c3_134, %c2_135] : memref<8x16xf32, #tpu.memory_space<smem>>
    %c3_136 = arith.constant 3 : index
    %c3_137 = arith.constant 3 : index
    %213 = memref.load %arg2[%c3_136, %c3_137] : memref<8x16xf32, #tpu.memory_space<smem>>
    %c3_138 = arith.constant 3 : index
    %c4_139 = arith.constant 4 : index
    %214 = memref.load %arg2[%c3_138, %c4_139] : memref<8x16xf32, #tpu.memory_space<smem>>
    %c3_140 = arith.constant 3 : index
    %c5_141 = arith.constant 5 : index
    %215 = memref.load %arg2[%c3_140, %c5_141] : memref<8x16xf32, #tpu.memory_space<smem>>
    %c3_142 = arith.constant 3 : index
    %c6_143 = arith.constant 6 : index
    %216 = memref.load %arg2[%c3_142, %c6_143] : memref<8x16xf32, #tpu.memory_space<smem>>
    %c3_144 = arith.constant 3 : index
    %c7_145 = arith.constant 7 : index
    %217 = memref.load %arg2[%c3_144, %c7_145] : memref<8x16xf32, #tpu.memory_space<smem>>
    %c3_146 = arith.constant 3 : index
    %c8_147 = arith.constant 8 : index
    %218 = memref.load %arg2[%c3_146, %c8_147] : memref<8x16xf32, #tpu.memory_space<smem>>
    %c3_148 = arith.constant 3 : index
    %c9_149 = arith.constant 9 : index
    %219 = memref.load %arg2[%c3_148, %c9_149] : memref<8x16xf32, #tpu.memory_space<smem>>
    %c3_150 = arith.constant 3 : index
    %c10_151 = arith.constant 10 : index
    %220 = memref.load %arg2[%c3_150, %c10_151] : memref<8x16xf32, #tpu.memory_space<smem>>
    %c3_152 = arith.constant 3 : index
    %c11_153 = arith.constant 11 : index
    %221 = memref.load %arg2[%c3_152, %c11_153] : memref<8x16xf32, #tpu.memory_space<smem>>
    %c3_154 = arith.constant 3 : index
    %c12_155 = arith.constant 12 : index
    %222 = memref.load %arg2[%c3_154, %c12_155] : memref<8x16xf32, #tpu.memory_space<smem>>
    %c3_156 = arith.constant 3 : index
    %c13_157 = arith.constant 13 : index
    %223 = memref.load %arg2[%c3_156, %c13_157] : memref<8x16xf32, #tpu.memory_space<smem>>
    %c3_158 = arith.constant 3 : index
    %c14_159 = arith.constant 14 : index
    %224 = memref.load %arg2[%c3_158, %c14_159] : memref<8x16xf32, #tpu.memory_space<smem>>
    %c3_160 = arith.constant 3 : index
    %c15_161 = arith.constant 15 : index
    %225 = memref.load %arg2[%c3_160, %c15_161] : memref<8x16xf32, #tpu.memory_space<smem>>
    %226 = vector.broadcast %210 : f32 to vector<2x128xf32>
    %227 = arith.mulf %226, %1 : vector<2x128xf32>
    %228 = vector.broadcast %211 : f32 to vector<2x128xf32>
    %229 = arith.mulf %228, %3 : vector<2x128xf32>
    %230 = arith.addf %227, %229 : vector<2x128xf32>
    %231 = vector.broadcast %212 : f32 to vector<2x128xf32>
    %232 = arith.mulf %231, %5 : vector<2x128xf32>
    %233 = arith.addf %230, %232 : vector<2x128xf32>
    %234 = vector.broadcast %219 : f32 to vector<2x128xf32>
    %235 = arith.subf %233, %234 : vector<2x128xf32>
    %236 = vector.broadcast %213 : f32 to vector<2x128xf32>
    %237 = arith.mulf %236, %1 : vector<2x128xf32>
    %238 = vector.broadcast %214 : f32 to vector<2x128xf32>
    %239 = arith.mulf %238, %3 : vector<2x128xf32>
    %240 = arith.addf %237, %239 : vector<2x128xf32>
    %241 = vector.broadcast %215 : f32 to vector<2x128xf32>
    %242 = arith.mulf %241, %5 : vector<2x128xf32>
    %243 = arith.addf %240, %242 : vector<2x128xf32>
    %244 = vector.broadcast %220 : f32 to vector<2x128xf32>
    %245 = arith.subf %243, %244 : vector<2x128xf32>
    %246 = vector.broadcast %216 : f32 to vector<2x128xf32>
    %247 = arith.mulf %246, %1 : vector<2x128xf32>
    %248 = vector.broadcast %217 : f32 to vector<2x128xf32>
    %249 = arith.mulf %248, %3 : vector<2x128xf32>
    %250 = arith.addf %247, %249 : vector<2x128xf32>
    %251 = vector.broadcast %218 : f32 to vector<2x128xf32>
    %252 = arith.mulf %251, %5 : vector<2x128xf32>
    %253 = arith.addf %250, %252 : vector<2x128xf32>
    %254 = vector.broadcast %221 : f32 to vector<2x128xf32>
    %255 = arith.subf %253, %254 : vector<2x128xf32>
    %cst_162 = arith.constant 9.99999974E-6 : f32
    %256 = vector.broadcast %cst_162 : f32 to vector<2x128xf32>
    %257 = arith.maximumf %255, %256 : vector<2x128xf32>
    %258 = tpu.reciprocal %257 : vector<2x128xf32> -> vector<2x128xf32>
    %259 = arith.mulf %235, %258 : vector<2x128xf32>
    %260 = vector.broadcast %222 : f32 to vector<2x128xf32>
    %261 = arith.mulf %260, %259 : vector<2x128xf32>
    %262 = vector.broadcast %224 : f32 to vector<2x128xf32>
    %263 = arith.addf %261, %262 : vector<2x128xf32>
    %c0_163 = arith.constant 0 : index
    %c6_164 = arith.constant 6 : index
    %c0_165 = arith.constant 0 : index
    %c0_166 = arith.constant 0 : index
    %264 = vector.load %arg4[%c0_163, %c6_164, %c0_165, %c0_166] : memref<1x16x2x128xf32, #tpu.memory_space<vmem>>, vector<1x1x2x128xf32>
    %265 = vector.shape_cast %264 : vector<1x1x2x128xf32> to vector<2x128xf32>
    %266 = vector.shape_cast %263 : vector<2x128xf32> to vector<1x1x2x128xf32>
    tpu.vector_store %arg4[%c0_163, %c6_164, %c0_165, %c0_166], %266 {strides = array<i32>} : memref<1x16x2x128xf32, #tpu.memory_space<vmem>>, vector<1x1x2x128xf32>,
    %267 = arith.mulf %245, %258 : vector<2x128xf32>
    %268 = vector.broadcast %223 : f32 to vector<2x128xf32>
    %269 = arith.mulf %268, %267 : vector<2x128xf32>
    %270 = vector.broadcast %225 : f32 to vector<2x128xf32>
    %271 = arith.addf %269, %270 : vector<2x128xf32>
    %c0_167 = arith.constant 0 : index
    %c7_168 = arith.constant 7 : index
    %c0_169 = arith.constant 0 : index
    %c0_170 = arith.constant 0 : index
    %272 = vector.load %arg4[%c0_167, %c7_168, %c0_169, %c0_170] : memref<1x16x2x128xf32, #tpu.memory_space<vmem>>, vector<1x1x2x128xf32>
    %273 = vector.shape_cast %272 : vector<1x1x2x128xf32> to vector<2x128xf32>
    %274 = vector.shape_cast %271 : vector<2x128xf32> to vector<1x1x2x128xf32>
    tpu.vector_store %arg4[%c0_167, %c7_168, %c0_169, %c0_170], %274 {strides = array<i32>} : memref<1x16x2x128xf32, #tpu.memory_space<vmem>>, vector<1x1x2x128xf32>,
    %c0_171 = arith.constant 0 : index
    %c3_172 = arith.constant 3 : index
    %c0_173 = arith.constant 0 : index
    %c0_174 = arith.constant 0 : index
    %275 = vector.load %arg5[%c0_171, %c3_172, %c0_173, %c0_174] : memref<1x8x2x128xf32, #tpu.memory_space<vmem>>, vector<1x1x2x128xf32>
    %276 = vector.shape_cast %275 : vector<1x1x2x128xf32> to vector<2x128xf32>
    %277 = vector.shape_cast %257 : vector<2x128xf32> to vector<1x1x2x128xf32>
    tpu.vector_store %arg5[%c0_171, %c3_172, %c0_173, %c0_174], %277 {strides = array<i32>} : memref<1x8x2x128xf32, #tpu.memory_space<vmem>>, vector<1x1x2x128xf32>,
    %c4_175 = arith.constant 4 : index
    %c0_176 = arith.constant 0 : index
    %278 = memref.load %arg2[%c4_175, %c0_176] : memref<8x16xf32, #tpu.memory_space<smem>>
    %c4_177 = arith.constant 4 : index
    %c1_178 = arith.constant 1 : index
    %279 = memref.load %arg2[%c4_177, %c1_178] : memref<8x16xf32, #tpu.memory_space<smem>>
    %c4_179 = arith.constant 4 : index
    %c2_180 = arith.constant 2 : index
    %280 = memref.load %arg2[%c4_179, %c2_180] : memref<8x16xf32, #tpu.memory_space<smem>>
    %c4_181 = arith.constant 4 : index
    %c3_182 = arith.constant 3 : index
    %281 = memref.load %arg2[%c4_181, %c3_182] : memref<8x16xf32, #tpu.memory_space<smem>>
    %c4_183 = arith.constant 4 : index
    %c4_184 = arith.constant 4 : index
    %282 = memref.load %arg2[%c4_183, %c4_184] : memref<8x16xf32, #tpu.memory_space<smem>>
    %c4_185 = arith.constant 4 : index
    %c5_186 = arith.constant 5 : index
    %283 = memref.load %arg2[%c4_185, %c5_186] : memref<8x16xf32, #tpu.memory_space<smem>>
    %c4_187 = arith.constant 4 : index
    %c6_188 = arith.constant 6 : index
    %284 = memref.load %arg2[%c4_187, %c6_188] : memref<8x16xf32, #tpu.memory_space<smem>>
    %c4_189 = arith.constant 4 : index
    %c7_190 = arith.constant 7 : index
    %285 = memref.load %arg2[%c4_189, %c7_190] : memref<8x16xf32, #tpu.memory_space<smem>>
    %c4_191 = arith.constant 4 : index
    %c8_192 = arith.constant 8 : index
    %286 = memref.load %arg2[%c4_191, %c8_192] : memref<8x16xf32, #tpu.memory_space<smem>>
    %c4_193 = arith.constant 4 : index
    %c9_194 = arith.constant 9 : index
    %287 = memref.load %arg2[%c4_193, %c9_194] : memref<8x16xf32, #tpu.memory_space<smem>>
    %c4_195 = arith.constant 4 : index
    %c10_196 = arith.constant 10 : index
    %288 = memref.load %arg2[%c4_195, %c10_196] : memref<8x16xf32, #tpu.memory_space<smem>>
    %c4_197 = arith.constant 4 : index
    %c11_198 = arith.constant 11 : index
    %289 = memref.load %arg2[%c4_197, %c11_198] : memref<8x16xf32, #tpu.memory_space<smem>>
    %c4_199 = arith.constant 4 : index
    %c12_200 = arith.constant 12 : index
    %290 = memref.load %arg2[%c4_199, %c12_200] : memref<8x16xf32, #tpu.memory_space<smem>>
    %c4_201 = arith.constant 4 : index
    %c13_202 = arith.constant 13 : index
    %291 = memref.load %arg2[%c4_201, %c13_202] : memref<8x16xf32, #tpu.memory_space<smem>>
    %c4_203 = arith.constant 4 : index
    %c14_204 = arith.constant 14 : index
    %292 = memref.load %arg2[%c4_203, %c14_204] : memref<8x16xf32, #tpu.memory_space<smem>>
    %c4_205 = arith.constant 4 : index
    %c15_206 = arith.constant 15 : index
    %293 = memref.load %arg2[%c4_205, %c15_206] : memref<8x16xf32, #tpu.memory_space<smem>>
    %294 = vector.broadcast %278 : f32 to vector<2x128xf32>
    %295 = arith.mulf %294, %1 : vector<2x128xf32>
    %296 = vector.broadcast %279 : f32 to vector<2x128xf32>
    %297 = arith.mulf %296, %3 : vector<2x128xf32>
    %298 = arith.addf %295, %297 : vector<2x128xf32>
    %299 = vector.broadcast %280 : f32 to vector<2x128xf32>
    %300 = arith.mulf %299, %5 : vector<2x128xf32>
    %301 = arith.addf %298, %300 : vector<2x128xf32>
    %302 = vector.broadcast %287 : f32 to vector<2x128xf32>
    %303 = arith.subf %301, %302 : vector<2x128xf32>
    %304 = vector.broadcast %281 : f32 to vector<2x128xf32>
    %305 = arith.mulf %304, %1 : vector<2x128xf32>
    %306 = vector.broadcast %282 : f32 to vector<2x128xf32>
    %307 = arith.mulf %306, %3 : vector<2x128xf32>
    %308 = arith.addf %305, %307 : vector<2x128xf32>
    %309 = vector.broadcast %283 : f32 to vector<2x128xf32>
    %310 = arith.mulf %309, %5 : vector<2x128xf32>
    %311 = arith.addf %308, %310 : vector<2x128xf32>
    %312 = vector.broadcast %288 : f32 to vector<2x128xf32>
    %313 = arith.subf %311, %312 : vector<2x128xf32>
    %314 = vector.broadcast %284 : f32 to vector<2x128xf32>
    %315 = arith.mulf %314, %1 : vector<2x128xf32>
    %316 = vector.broadcast %285 : f32 to vector<2x128xf32>
    %317 = arith.mulf %316, %3 : vector<2x128xf32>
    %318 = arith.addf %315, %317 : vector<2x128xf32>
    %319 = vector.broadcast %286 : f32 to vector<2x128xf32>
    %320 = arith.mulf %319, %5 : vector<2x128xf32>
    %321 = arith.addf %318, %320 : vector<2x128xf32>
    %322 = vector.broadcast %289 : f32 to vector<2x128xf32>
    %323 = arith.subf %321, %322 : vector<2x128xf32>
    %cst_207 = arith.constant 9.99999974E-6 : f32
    %324 = vector.broadcast %cst_207 : f32 to vector<2x128xf32>
    %325 = arith.maximumf %323, %324 : vector<2x128xf32>
    %326 = tpu.reciprocal %325 : vector<2x128xf32> -> vector<2x128xf32>
    %327 = arith.mulf %303, %326 : vector<2x128xf32>
    %328 = vector.broadcast %290 : f32 to vector<2x128xf32>
    %329 = arith.mulf %328, %327 : vector<2x128xf32>
    %330 = vector.broadcast %292 : f32 to vector<2x128xf32>
    %331 = arith.addf %329, %330 : vector<2x128xf32>
    %c0_208 = arith.constant 0 : index
    %c8_209 = arith.constant 8 : index
    %c0_210 = arith.constant 0 : index
    %c0_211 = arith.constant 0 : index
    %332 = vector.load %arg4[%c0_208, %c8_209, %c0_210, %c0_211] : memref<1x16x2x128xf32, #tpu.memory_space<vmem>>, vector<1x1x2x128xf32>
    %333 = vector.shape_cast %332 : vector<1x1x2x128xf32> to vector<2x128xf32>
    %334 = vector.shape_cast %331 : vector<2x128xf32> to vector<1x1x2x128xf32>
    tpu.vector_store %arg4[%c0_208, %c8_209, %c0_210, %c0_211], %334 {strides = array<i32>} : memref<1x16x2x128xf32, #tpu.memory_space<vmem>>, vector<1x1x2x128xf32>,
    %335 = arith.mulf %313, %326 : vector<2x128xf32>
    %336 = vector.broadcast %291 : f32 to vector<2x128xf32>
    %337 = arith.mulf %336, %335 : vector<2x128xf32>
    %338 = vector.broadcast %293 : f32 to vector<2x128xf32>
    %339 = arith.addf %337, %338 : vector<2x128xf32>
    %c0_212 = arith.constant 0 : index
    %c9_213 = arith.constant 9 : index
    %c0_214 = arith.constant 0 : index
    %c0_215 = arith.constant 0 : index
    %340 = vector.load %arg4[%c0_212, %c9_213, %c0_214, %c0_215] : memref<1x16x2x128xf32, #tpu.memory_space<vmem>>, vector<1x1x2x128xf32>
    %341 = vector.shape_cast %340 : vector<1x1x2x128xf32> to vector<2x128xf32>
    %342 = vector.shape_cast %339 : vector<2x128xf32> to vector<1x1x2x128xf32>
    tpu.vector_store %arg4[%c0_212, %c9_213, %c0_214, %c0_215], %342 {strides = array<i32>} : memref<1x16x2x128xf32, #tpu.memory_space<vmem>>, vector<1x1x2x128xf32>,
    %c0_216 = arith.constant 0 : index
    %c4_217 = arith.constant 4 : index
    %c0_218 = arith.constant 0 : index
    %c0_219 = arith.constant 0 : index
    %343 = vector.load %arg5[%c0_216, %c4_217, %c0_218, %c0_219] : memref<1x8x2x128xf32, #tpu.memory_space<vmem>>, vector<1x1x2x128xf32>
    %344 = vector.shape_cast %343 : vector<1x1x2x128xf32> to vector<2x128xf32>
    %345 = vector.shape_cast %325 : vector<2x128xf32> to vector<1x1x2x128xf32>
    tpu.vector_store %arg5[%c0_216, %c4_217, %c0_218, %c0_219], %345 {strides = array<i32>} : memref<1x8x2x128xf32, #tpu.memory_space<vmem>>, vector<1x1x2x128xf32>,
    %c5_220 = arith.constant 5 : index
    %c0_221 = arith.constant 0 : index
    %346 = memref.load %arg2[%c5_220, %c0_221] : memref<8x16xf32, #tpu.memory_space<smem>>
    %c5_222 = arith.constant 5 : index
    %c1_223 = arith.constant 1 : index
    %347 = memref.load %arg2[%c5_222, %c1_223] : memref<8x16xf32, #tpu.memory_space<smem>>
    %c5_224 = arith.constant 5 : index
    %c2_225 = arith.constant 2 : index
    %348 = memref.load %arg2[%c5_224, %c2_225] : memref<8x16xf32, #tpu.memory_space<smem>>
    %c5_226 = arith.constant 5 : index
    %c3_227 = arith.constant 3 : index
    %349 = memref.load %arg2[%c5_226, %c3_227] : memref<8x16xf32, #tpu.memory_space<smem>>
    %c5_228 = arith.constant 5 : index
    %c4_229 = arith.constant 4 : index
    %350 = memref.load %arg2[%c5_228, %c4_229] : memref<8x16xf32, #tpu.memory_space<smem>>
    %c5_230 = arith.constant 5 : index
    %c5_231 = arith.constant 5 : index
    %351 = memref.load %arg2[%c5_230, %c5_231] : memref<8x16xf32, #tpu.memory_space<smem>>
    %c5_232 = arith.constant 5 : index
    %c6_233 = arith.constant 6 : index
    %352 = memref.load %arg2[%c5_232, %c6_233] : memref<8x16xf32, #tpu.memory_space<smem>>
    %c5_234 = arith.constant 5 : index
    %c7_235 = arith.constant 7 : index
    %353 = memref.load %arg2[%c5_234, %c7_235] : memref<8x16xf32, #tpu.memory_space<smem>>
    %c5_236 = arith.constant 5 : index
    %c8_237 = arith.constant 8 : index
    %354 = memref.load %arg2[%c5_236, %c8_237] : memref<8x16xf32, #tpu.memory_space<smem>>
    %c5_238 = arith.constant 5 : index
    %c9_239 = arith.constant 9 : index
    %355 = memref.load %arg2[%c5_238, %c9_239] : memref<8x16xf32, #tpu.memory_space<smem>>
    %c5_240 = arith.constant 5 : index
    %c10_241 = arith.constant 10 : index
    %356 = memref.load %arg2[%c5_240, %c10_241] : memref<8x16xf32, #tpu.memory_space<smem>>
    %c5_242 = arith.constant 5 : index
    %c11_243 = arith.constant 11 : index
    %357 = memref.load %arg2[%c5_242, %c11_243] : memref<8x16xf32, #tpu.memory_space<smem>>
    %c5_244 = arith.constant 5 : index
    %c12_245 = arith.constant 12 : index
    %358 = memref.load %arg2[%c5_244, %c12_245] : memref<8x16xf32, #tpu.memory_space<smem>>
    %c5_246 = arith.constant 5 : index
    %c13_247 = arith.constant 13 : index
    %359 = memref.load %arg2[%c5_246, %c13_247] : memref<8x16xf32, #tpu.memory_space<smem>>
    %c5_248 = arith.constant 5 : index
    %c14_249 = arith.constant 14 : index
    %360 = memref.load %arg2[%c5_248, %c14_249] : memref<8x16xf32, #tpu.memory_space<smem>>
    %c5_250 = arith.constant 5 : index
    %c15_251 = arith.constant 15 : index
    %361 = memref.load %arg2[%c5_250, %c15_251] : memref<8x16xf32, #tpu.memory_space<smem>>
    %362 = vector.broadcast %346 : f32 to vector<2x128xf32>
    %363 = arith.mulf %362, %1 : vector<2x128xf32>
    %364 = vector.broadcast %347 : f32 to vector<2x128xf32>
    %365 = arith.mulf %364, %3 : vector<2x128xf32>
    %366 = arith.addf %363, %365 : vector<2x128xf32>
    %367 = vector.broadcast %348 : f32 to vector<2x128xf32>
    %368 = arith.mulf %367, %5 : vector<2x128xf32>
    %369 = arith.addf %366, %368 : vector<2x128xf32>
    %370 = vector.broadcast %355 : f32 to vector<2x128xf32>
    %371 = arith.subf %369, %370 : vector<2x128xf32>
    %372 = vector.broadcast %349 : f32 to vector<2x128xf32>
    %373 = arith.mulf %372, %1 : vector<2x128xf32>
    %374 = vector.broadcast %350 : f32 to vector<2x128xf32>
    %375 = arith.mulf %374, %3 : vector<2x128xf32>
    %376 = arith.addf %373, %375 : vector<2x128xf32>
    %377 = vector.broadcast %351 : f32 to vector<2x128xf32>
    %378 = arith.mulf %377, %5 : vector<2x128xf32>
    %379 = arith.addf %376, %378 : vector<2x128xf32>
    %380 = vector.broadcast %356 : f32 to vector<2x128xf32>
    %381 = arith.subf %379, %380 : vector<2x128xf32>
    %382 = vector.broadcast %352 : f32 to vector<2x128xf32>
    %383 = arith.mulf %382, %1 : vector<2x128xf32>
    %384 = vector.broadcast %353 : f32 to vector<2x128xf32>
    %385 = arith.mulf %384, %3 : vector<2x128xf32>
    %386 = arith.addf %383, %385 : vector<2x128xf32>
    %387 = vector.broadcast %354 : f32 to vector<2x128xf32>
    %388 = arith.mulf %387, %5 : vector<2x128xf32>
    %389 = arith.addf %386, %388 : vector<2x128xf32>
    %390 = vector.broadcast %357 : f32 to vector<2x128xf32>
    %391 = arith.subf %389, %390 : vector<2x128xf32>
    %cst_252 = arith.constant 9.99999974E-6 : f32
    %392 = vector.broadcast %cst_252 : f32 to vector<2x128xf32>
    %393 = arith.maximumf %391, %392 : vector<2x128xf32>
    %394 = tpu.reciprocal %393 : vector<2x128xf32> -> vector<2x128xf32>
    %395 = arith.mulf %371, %394 : vector<2x128xf32>
    %396 = vector.broadcast %358 : f32 to vector<2x128xf32>
    %397 = arith.mulf %396, %395 : vector<2x128xf32>
    %398 = vector.broadcast %360 : f32 to vector<2x128xf32>
    %399 = arith.addf %397, %398 : vector<2x128xf32>
    %c0_253 = arith.constant 0 : index
    %c10_254 = arith.constant 10 : index
    %c0_255 = arith.constant 0 : index
    %c0_256 = arith.constant 0 : index
    %400 = vector.load %arg4[%c0_253, %c10_254, %c0_255, %c0_256] : memref<1x16x2x128xf32, #tpu.memory_space<vmem>>, vector<1x1x2x128xf32>
    %401 = vector.shape_cast %400 : vector<1x1x2x128xf32> to vector<2x128xf32>
    %402 = vector.shape_cast %399 : vector<2x128xf32> to vector<1x1x2x128xf32>
    tpu.vector_store %arg4[%c0_253, %c10_254, %c0_255, %c0_256], %402 {strides = array<i32>} : memref<1x16x2x128xf32, #tpu.memory_space<vmem>>, vector<1x1x2x128xf32>,
    %403 = arith.mulf %381, %394 : vector<2x128xf32>
    %404 = vector.broadcast %359 : f32 to vector<2x128xf32>
    %405 = arith.mulf %404, %403 : vector<2x128xf32>
    %406 = vector.broadcast %361 : f32 to vector<2x128xf32>
    %407 = arith.addf %405, %406 : vector<2x128xf32>
    %c0_257 = arith.constant 0 : index
    %c11_258 = arith.constant 11 : index
    %c0_259 = arith.constant 0 : index
    %c0_260 = arith.constant 0 : index
    %408 = vector.load %arg4[%c0_257, %c11_258, %c0_259, %c0_260] : memref<1x16x2x128xf32, #tpu.memory_space<vmem>>, vector<1x1x2x128xf32>
    %409 = vector.shape_cast %408 : vector<1x1x2x128xf32> to vector<2x128xf32>
    %410 = vector.shape_cast %407 : vector<2x128xf32> to vector<1x1x2x128xf32>
    tpu.vector_store %arg4[%c0_257, %c11_258, %c0_259, %c0_260], %410 {strides = array<i32>} : memref<1x16x2x128xf32, #tpu.memory_space<vmem>>, vector<1x1x2x128xf32>,
    %c0_261 = arith.constant 0 : index
    %c5_262 = arith.constant 5 : index
    %c0_263 = arith.constant 0 : index
    %c0_264 = arith.constant 0 : index
    %411 = vector.load %arg5[%c0_261, %c5_262, %c0_263, %c0_264] : memref<1x8x2x128xf32, #tpu.memory_space<vmem>>, vector<1x1x2x128xf32>
    %412 = vector.shape_cast %411 : vector<1x1x2x128xf32> to vector<2x128xf32>
    %413 = vector.shape_cast %393 : vector<2x128xf32> to vector<1x1x2x128xf32>
    tpu.vector_store %arg5[%c0_261, %c5_262, %c0_263, %c0_264], %413 {strides = array<i32>} : memref<1x8x2x128xf32, #tpu.memory_space<vmem>>, vector<1x1x2x128xf32>,
    %c6_265 = arith.constant 6 : index
    %c0_266 = arith.constant 0 : index
    %414 = memref.load %arg2[%c6_265, %c0_266] : memref<8x16xf32, #tpu.memory_space<smem>>
    %c6_267 = arith.constant 6 : index
    %c1_268 = arith.constant 1 : index
    %415 = memref.load %arg2[%c6_267, %c1_268] : memref<8x16xf32, #tpu.memory_space<smem>>
    %c6_269 = arith.constant 6 : index
    %c2_270 = arith.constant 2 : index
    %416 = memref.load %arg2[%c6_269, %c2_270] : memref<8x16xf32, #tpu.memory_space<smem>>
    %c6_271 = arith.constant 6 : index
    %c3_272 = arith.constant 3 : index
    %417 = memref.load %arg2[%c6_271, %c3_272] : memref<8x16xf32, #tpu.memory_space<smem>>
    %c6_273 = arith.constant 6 : index
    %c4_274 = arith.constant 4 : index
    %418 = memref.load %arg2[%c6_273, %c4_274] : memref<8x16xf32, #tpu.memory_space<smem>>
    %c6_275 = arith.constant 6 : index
    %c5_276 = arith.constant 5 : index
    %419 = memref.load %arg2[%c6_275, %c5_276] : memref<8x16xf32, #tpu.memory_space<smem>>
    %c6_277 = arith.constant 6 : index
    %c6_278 = arith.constant 6 : index
    %420 = memref.load %arg2[%c6_277, %c6_278] : memref<8x16xf32, #tpu.memory_space<smem>>
    %c6_279 = arith.constant 6 : index
    %c7_280 = arith.constant 7 : index
    %421 = memref.load %arg2[%c6_279, %c7_280] : memref<8x16xf32, #tpu.memory_space<smem>>
    %c6_281 = arith.constant 6 : index
    %c8_282 = arith.constant 8 : index
    %422 = memref.load %arg2[%c6_281, %c8_282] : memref<8x16xf32, #tpu.memory_space<smem>>
    %c6_283 = arith.constant 6 : index
    %c9_284 = arith.constant 9 : index
    %423 = memref.load %arg2[%c6_283, %c9_284] : memref<8x16xf32, #tpu.memory_space<smem>>
    %c6_285 = arith.constant 6 : index
    %c10_286 = arith.constant 10 : index
    %424 = memref.load %arg2[%c6_285, %c10_286] : memref<8x16xf32, #tpu.memory_space<smem>>
    %c6_287 = arith.constant 6 : index
    %c11_288 = arith.constant 11 : index
    %425 = memref.load %arg2[%c6_287, %c11_288] : memref<8x16xf32, #tpu.memory_space<smem>>
    %c6_289 = arith.constant 6 : index
    %c12_290 = arith.constant 12 : index
    %426 = memref.load %arg2[%c6_289, %c12_290] : memref<8x16xf32, #tpu.memory_space<smem>>
    %c6_291 = arith.constant 6 : index
    %c13_292 = arith.constant 13 : index
    %427 = memref.load %arg2[%c6_291, %c13_292] : memref<8x16xf32, #tpu.memory_space<smem>>
    %c6_293 = arith.constant 6 : index
    %c14_294 = arith.constant 14 : index
    %428 = memref.load %arg2[%c6_293, %c14_294] : memref<8x16xf32, #tpu.memory_space<smem>>
    %c6_295 = arith.constant 6 : index
    %c15_296 = arith.constant 15 : index
    %429 = memref.load %arg2[%c6_295, %c15_296] : memref<8x16xf32, #tpu.memory_space<smem>>
    %430 = vector.broadcast %414 : f32 to vector<2x128xf32>
    %431 = arith.mulf %430, %1 : vector<2x128xf32>
    %432 = vector.broadcast %415 : f32 to vector<2x128xf32>
    %433 = arith.mulf %432, %3 : vector<2x128xf32>
    %434 = arith.addf %431, %433 : vector<2x128xf32>
    %435 = vector.broadcast %416 : f32 to vector<2x128xf32>
    %436 = arith.mulf %435, %5 : vector<2x128xf32>
    %437 = arith.addf %434, %436 : vector<2x128xf32>
    %438 = vector.broadcast %423 : f32 to vector<2x128xf32>
    %439 = arith.subf %437, %438 : vector<2x128xf32>
    %440 = vector.broadcast %417 : f32 to vector<2x128xf32>
    %441 = arith.mulf %440, %1 : vector<2x128xf32>
    %442 = vector.broadcast %418 : f32 to vector<2x128xf32>
    %443 = arith.mulf %442, %3 : vector<2x128xf32>
    %444 = arith.addf %441, %443 : vector<2x128xf32>
    %445 = vector.broadcast %419 : f32 to vector<2x128xf32>
    %446 = arith.mulf %445, %5 : vector<2x128xf32>
    %447 = arith.addf %444, %446 : vector<2x128xf32>
    %448 = vector.broadcast %424 : f32 to vector<2x128xf32>
    %449 = arith.subf %447, %448 : vector<2x128xf32>
    %450 = vector.broadcast %420 : f32 to vector<2x128xf32>
    %451 = arith.mulf %450, %1 : vector<2x128xf32>
    %452 = vector.broadcast %421 : f32 to vector<2x128xf32>
    %453 = arith.mulf %452, %3 : vector<2x128xf32>
    %454 = arith.addf %451, %453 : vector<2x128xf32>
    %455 = vector.broadcast %422 : f32 to vector<2x128xf32>
    %456 = arith.mulf %455, %5 : vector<2x128xf32>
    %457 = arith.addf %454, %456 : vector<2x128xf32>
    %458 = vector.broadcast %425 : f32 to vector<2x128xf32>
    %459 = arith.subf %457, %458 : vector<2x128xf32>
    %cst_297 = arith.constant 9.99999974E-6 : f32
    %460 = vector.broadcast %cst_297 : f32 to vector<2x128xf32>
    %461 = arith.maximumf %459, %460 : vector<2x128xf32>
    %462 = tpu.reciprocal %461 : vector<2x128xf32> -> vector<2x128xf32>
    %463 = arith.mulf %439, %462 : vector<2x128xf32>
    %464 = vector.broadcast %426 : f32 to vector<2x128xf32>
    %465 = arith.mulf %464, %463 : vector<2x128xf32>
    %466 = vector.broadcast %428 : f32 to vector<2x128xf32>
    %467 = arith.addf %465, %466 : vector<2x128xf32>
    %c0_298 = arith.constant 0 : index
    %c12_299 = arith.constant 12 : index
    %c0_300 = arith.constant 0 : index
    %c0_301 = arith.constant 0 : index
    %468 = vector.load %arg4[%c0_298, %c12_299, %c0_300, %c0_301] : memref<1x16x2x128xf32, #tpu.memory_space<vmem>>, vector<1x1x2x128xf32>
    %469 = vector.shape_cast %468 : vector<1x1x2x128xf32> to vector<2x128xf32>
    %470 = vector.shape_cast %467 : vector<2x128xf32> to vector<1x1x2x128xf32>
    tpu.vector_store %arg4[%c0_298, %c12_299, %c0_300, %c0_301], %470 {strides = array<i32>} : memref<1x16x2x128xf32, #tpu.memory_space<vmem>>, vector<1x1x2x128xf32>,
    %471 = arith.mulf %449, %462 : vector<2x128xf32>
    %472 = vector.broadcast %427 : f32 to vector<2x128xf32>
    %473 = arith.mulf %472, %471 : vector<2x128xf32>
    %474 = vector.broadcast %429 : f32 to vector<2x128xf32>
    %475 = arith.addf %473, %474 : vector<2x128xf32>
    %c0_302 = arith.constant 0 : index
    %c13_303 = arith.constant 13 : index
    %c0_304 = arith.constant 0 : index
    %c0_305 = arith.constant 0 : index
    %476 = vector.load %arg4[%c0_302, %c13_303, %c0_304, %c0_305] : memref<1x16x2x128xf32, #tpu.memory_space<vmem>>, vector<1x1x2x128xf32>
    %477 = vector.shape_cast %476 : vector<1x1x2x128xf32> to vector<2x128xf32>
    %478 = vector.shape_cast %475 : vector<2x128xf32> to vector<1x1x2x128xf32>
    tpu.vector_store %arg4[%c0_302, %c13_303, %c0_304, %c0_305], %478 {strides = array<i32>} : memref<1x16x2x128xf32, #tpu.memory_space<vmem>>, vector<1x1x2x128xf32>,
    %c0_306 = arith.constant 0 : index
    %c6_307 = arith.constant 6 : index
    %c0_308 = arith.constant 0 : index
    %c0_309 = arith.constant 0 : index
    %479 = vector.load %arg5[%c0_306, %c6_307, %c0_308, %c0_309] : memref<1x8x2x128xf32, #tpu.memory_space<vmem>>, vector<1x1x2x128xf32>
    %480 = vector.shape_cast %479 : vector<1x1x2x128xf32> to vector<2x128xf32>
    %481 = vector.shape_cast %461 : vector<2x128xf32> to vector<1x1x2x128xf32>
    tpu.vector_store %arg5[%c0_306, %c6_307, %c0_308, %c0_309], %481 {strides = array<i32>} : memref<1x8x2x128xf32, #tpu.memory_space<vmem>>, vector<1x1x2x128xf32>,
    %c7_310 = arith.constant 7 : index
    %c0_311 = arith.constant 0 : index
    %482 = memref.load %arg2[%c7_310, %c0_311] : memref<8x16xf32, #tpu.memory_space<smem>>
    %c7_312 = arith.constant 7 : index
    %c1_313 = arith.constant 1 : index
    %483 = memref.load %arg2[%c7_312, %c1_313] : memref<8x16xf32, #tpu.memory_space<smem>>
    %c7_314 = arith.constant 7 : index
    %c2_315 = arith.constant 2 : index
    %484 = memref.load %arg2[%c7_314, %c2_315] : memref<8x16xf32, #tpu.memory_space<smem>>
    %c7_316 = arith.constant 7 : index
    %c3_317 = arith.constant 3 : index
    %485 = memref.load %arg2[%c7_316, %c3_317] : memref<8x16xf32, #tpu.memory_space<smem>>
    %c7_318 = arith.constant 7 : index
    %c4_319 = arith.constant 4 : index
    %486 = memref.load %arg2[%c7_318, %c4_319] : memref<8x16xf32, #tpu.memory_space<smem>>
    %c7_320 = arith.constant 7 : index
    %c5_321 = arith.constant 5 : index
    %487 = memref.load %arg2[%c7_320, %c5_321] : memref<8x16xf32, #tpu.memory_space<smem>>
    %c7_322 = arith.constant 7 : index
    %c6_323 = arith.constant 6 : index
    %488 = memref.load %arg2[%c7_322, %c6_323] : memref<8x16xf32, #tpu.memory_space<smem>>
    %c7_324 = arith.constant 7 : index
    %c7_325 = arith.constant 7 : index
    %489 = memref.load %arg2[%c7_324, %c7_325] : memref<8x16xf32, #tpu.memory_space<smem>>
    %c7_326 = arith.constant 7 : index
    %c8_327 = arith.constant 8 : index
    %490 = memref.load %arg2[%c7_326, %c8_327] : memref<8x16xf32, #tpu.memory_space<smem>>
    %c7_328 = arith.constant 7 : index
    %c9_329 = arith.constant 9 : index
    %491 = memref.load %arg2[%c7_328, %c9_329] : memref<8x16xf32, #tpu.memory_space<smem>>
    %c7_330 = arith.constant 7 : index
    %c10_331 = arith.constant 10 : index
    %492 = memref.load %arg2[%c7_330, %c10_331] : memref<8x16xf32, #tpu.memory_space<smem>>
    %c7_332 = arith.constant 7 : index
    %c11_333 = arith.constant 11 : index
    %493 = memref.load %arg2[%c7_332, %c11_333] : memref<8x16xf32, #tpu.memory_space<smem>>
    %c7_334 = arith.constant 7 : index
    %c12_335 = arith.constant 12 : index
    %494 = memref.load %arg2[%c7_334, %c12_335] : memref<8x16xf32, #tpu.memory_space<smem>>
    %c7_336 = arith.constant 7 : index
    %c13_337 = arith.constant 13 : index
    %495 = memref.load %arg2[%c7_336, %c13_337] : memref<8x16xf32, #tpu.memory_space<smem>>
    %c7_338 = arith.constant 7 : index
    %c14_339 = arith.constant 14 : index
    %496 = memref.load %arg2[%c7_338, %c14_339] : memref<8x16xf32, #tpu.memory_space<smem>>
    %c7_340 = arith.constant 7 : index
    %c15_341 = arith.constant 15 : index
    %497 = memref.load %arg2[%c7_340, %c15_341] : memref<8x16xf32, #tpu.memory_space<smem>>
    %498 = vector.broadcast %482 : f32 to vector<2x128xf32>
    %499 = arith.mulf %498, %1 : vector<2x128xf32>
    %500 = vector.broadcast %483 : f32 to vector<2x128xf32>
    %501 = arith.mulf %500, %3 : vector<2x128xf32>
    %502 = arith.addf %499, %501 : vector<2x128xf32>
    %503 = vector.broadcast %484 : f32 to vector<2x128xf32>
    %504 = arith.mulf %503, %5 : vector<2x128xf32>
    %505 = arith.addf %502, %504 : vector<2x128xf32>
    %506 = vector.broadcast %491 : f32 to vector<2x128xf32>
    %507 = arith.subf %505, %506 : vector<2x128xf32>
    %508 = vector.broadcast %485 : f32 to vector<2x128xf32>
    %509 = arith.mulf %508, %1 : vector<2x128xf32>
    %510 = vector.broadcast %486 : f32 to vector<2x128xf32>
    %511 = arith.mulf %510, %3 : vector<2x128xf32>
    %512 = arith.addf %509, %511 : vector<2x128xf32>
    %513 = vector.broadcast %487 : f32 to vector<2x128xf32>
    %514 = arith.mulf %513, %5 : vector<2x128xf32>
    %515 = arith.addf %512, %514 : vector<2x128xf32>
    %516 = vector.broadcast %492 : f32 to vector<2x128xf32>
    %517 = arith.subf %515, %516 : vector<2x128xf32>
    %518 = vector.broadcast %488 : f32 to vector<2x128xf32>
    %519 = arith.mulf %518, %1 : vector<2x128xf32>
    %520 = vector.broadcast %489 : f32 to vector<2x128xf32>
    %521 = arith.mulf %520, %3 : vector<2x128xf32>
    %522 = arith.addf %519, %521 : vector<2x128xf32>
    %523 = vector.broadcast %490 : f32 to vector<2x128xf32>
    %524 = arith.mulf %523, %5 : vector<2x128xf32>
    %525 = arith.addf %522, %524 : vector<2x128xf32>
    %526 = vector.broadcast %493 : f32 to vector<2x128xf32>
    %527 = arith.subf %525, %526 : vector<2x128xf32>
    %cst_342 = arith.constant 9.99999974E-6 : f32
    %528 = vector.broadcast %cst_342 : f32 to vector<2x128xf32>
    %529 = arith.maximumf %527, %528 : vector<2x128xf32>
    %530 = tpu.reciprocal %529 : vector<2x128xf32> -> vector<2x128xf32>
    %531 = arith.mulf %507, %530 : vector<2x128xf32>
    %532 = vector.broadcast %494 : f32 to vector<2x128xf32>
    %533 = arith.mulf %532, %531 : vector<2x128xf32>
    %534 = vector.broadcast %496 : f32 to vector<2x128xf32>
    %535 = arith.addf %533, %534 : vector<2x128xf32>
    %c0_343 = arith.constant 0 : index
    %c14_344 = arith.constant 14 : index
    %c0_345 = arith.constant 0 : index
    %c0_346 = arith.constant 0 : index
    %536 = vector.load %arg4[%c0_343, %c14_344, %c0_345, %c0_346] : memref<1x16x2x128xf32, #tpu.memory_space<vmem>>, vector<1x1x2x128xf32>
    %537 = vector.shape_cast %536 : vector<1x1x2x128xf32> to vector<2x128xf32>
    %538 = vector.shape_cast %535 : vector<2x128xf32> to vector<1x1x2x128xf32>
    tpu.vector_store %arg4[%c0_343, %c14_344, %c0_345, %c0_346], %538 {strides = array<i32>} : memref<1x16x2x128xf32, #tpu.memory_space<vmem>>, vector<1x1x2x128xf32>,
    %539 = arith.mulf %517, %530 : vector<2x128xf32>
    %540 = vector.broadcast %495 : f32 to vector<2x128xf32>
    %541 = arith.mulf %540, %539 : vector<2x128xf32>
    %542 = vector.broadcast %497 : f32 to vector<2x128xf32>
    %543 = arith.addf %541, %542 : vector<2x128xf32>
    %c0_347 = arith.constant 0 : index
    %c15_348 = arith.constant 15 : index
    %c0_349 = arith.constant 0 : index
    %c0_350 = arith.constant 0 : index
    %544 = vector.load %arg4[%c0_347, %c15_348, %c0_349, %c0_350] : memref<1x16x2x128xf32, #tpu.memory_space<vmem>>, vector<1x1x2x128xf32>
    %545 = vector.shape_cast %544 : vector<1x1x2x128xf32> to vector<2x128xf32>
    %546 = vector.shape_cast %543 : vector<2x128xf32> to vector<1x1x2x128xf32>
    tpu.vector_store %arg4[%c0_347, %c15_348, %c0_349, %c0_350], %546 {strides = array<i32>} : memref<1x16x2x128xf32, #tpu.memory_space<vmem>>, vector<1x1x2x128xf32>,
    %c0_351 = arith.constant 0 : index
    %c7_352 = arith.constant 7 : index
    %c0_353 = arith.constant 0 : index
    %c0_354 = arith.constant 0 : index
    %547 = vector.load %arg5[%c0_351, %c7_352, %c0_353, %c0_354] : memref<1x8x2x128xf32, #tpu.memory_space<vmem>>, vector<1x1x2x128xf32>
    %548 = vector.shape_cast %547 : vector<1x1x2x128xf32> to vector<2x128xf32>
    %549 = vector.shape_cast %529 : vector<2x128xf32> to vector<1x1x2x128xf32>
    tpu.vector_store %arg5[%c0_351, %c7_352, %c0_353, %c0_354], %549 {strides = array<i32>} : memref<1x8x2x128xf32, #tpu.memory_space<vmem>>, vector<1x1x2x128xf32>,
    return
  }
  func.func @transform_0(%arg0: i32, %arg1: i32) -> (i32, i32) {
    %c0_i32 = arith.constant 0 : i32
    %c0_i32_0 = arith.constant 0 : i32
    %c0_i32_1 = arith.constant 0 : i32
    return %c0_i32, %c0_i32_0 : i32, i32
  }
  func.func @transform_1(%arg0: i32, %arg1: i32) -> (i32, i32, i32, i32) {
    %c0_i32 = arith.constant 0 : i32
    %c0_i32_0 = arith.constant 0 : i32
    %c0_i32_1 = arith.constant 0 : i32
    return %arg0, %c0_i32, %arg1, %c0_i32_0 : i32, i32, i32, i32
  }
  func.func @transform_2(%arg0: i32, %arg1: i32) -> (i32, i32, i32, i32) {
    %c0_i32 = arith.constant 0 : i32
    %c0_i32_0 = arith.constant 0 : i32
    %c0_i32_1 = arith.constant 0 : i32
    return %arg0, %c0_i32, %arg1, %c0_i32_0 : i32, i32, i32, i32
  }
  func.func @transform_3(%arg0: i32, %arg1: i32) -> (i32, i32, i32, i32) {
    %c0_i32 = arith.constant 0 : i32
    %c0_i32_0 = arith.constant 0 : i32
    %c0_i32_1 = arith.constant 0 : i32
    return %arg0, %c0_i32, %arg1, %c0_i32_0 : i32, i32, i32, i32
  }
}

</mosaic_0001>

<llo_original>
// kernel: _forward_impl.1
$region0: #{_forward_impl.1}
  #allocation0 [shape = 'u32[]', space=smem, size = 0x4, offset = 0x4, fixed_abs, tag = 'smem constant byte address 0x4 - core index']
  #allocation1 [shape = 'u32[144,128]{1,0:T(1,128)}', space=vmem, size = 0x12000, scoped, tag = 'internal scratch']
  %s0 = inlined_call_operand.vmem [shape: f32[8,16], index: 0, kind: input, shape index: {}]
  %s1 = inlined_call_operand.vmem [shape: f32[2,3,2,128], index: 1, kind: input, shape index: {}]
  %s2 = inlined_call_operand.vmem [shape: f32[2,16,2,128], index: 2, kind: output, shape index: {0}]
  %s3 = inlined_call_operand.vmem [shape: f32[2,8,2,128], index: 3, kind: output, shape index: {1}]
  %4 = xla_tuple %s2, %s3
  %s5 = sld [smem:[#allocation0]]
  $region53: #{_forward_impl.1} parent=0
    _
  %s7 = ssub.s32 1, %s5
  %s8 = scalar_select 0, %s7, %s5
  $region1: #{_forward_impl.1} parent=0
    #allocation2 [shape = 'u8[4096]{0}', space=smem, size = 0x1000, scoped, tag = 'input window, operand 0, single buffered']
    #allocation3 [shape = 's32[2]{0}', space=sflag, size = 0x8, scoped, tag = 'scoped memory for _forward_impl.1']
    %9 = vsyncpa [#allocation3], 0
    loop: start=0, step=1, limit=4
    $region2: #{_forward_impl.1} parent=1 // loop_pre_header
      _
    $region3: #{_forward_impl.1} parent=1 // loop_header
      %s11 = sphi 0, %s15
      %p12 = scmp.ge.s32.totalorder %s11, 4
      %s18 = sphi 0, %s30
      %s19 = sphi 0, %s26
      %s20 = sphi 0, %s18
      %s21 = sphi 0, %s19
      %s22 = sphi 0, %s20
      %s23 = sphi 0, %s21
      %s31 = sphi 0, %s31
      %s33 = sphi 0, %s31
      %s34 = sphi 0, %s33
      %s48 = sphi 0, %s34
      %s56 = sphi 0, %s58
      %s59 = sphi 0, %s56
      %s60 = sphi 0, %s59
      %s76 = sphi 0, %s60
      %s84 = sphi 0, %s86
      %s87 = sphi 0, %s84
      %s88 = sphi 0, %s87
      %s104 = sphi 0, %s88
      %s112 = sphi 0, %s114
      %s115 = sphi 0, %s112
      %s116 = sphi 0, %s115
      %s132 = sphi 0, %s116
    $region4: #{_forward_impl.1} parent=1 // loop_header_branch
      %14 = sbr.rel (%p12) target = $region8
    $region5: #{_forward_impl.1} parent=1 // loop_body
      %s16 = ssub.s32 %s11, 1
      %s17 = ssub.s32 %s11, 2
      %s24 = sadd.s32 1, %s19
      %p25 = scmp.ge.s32.totalorder %s24, 1
      %s26 = scalar_select %p25, 0, %s24
      %s27 = sadd.s32 1, %s18
      %s28 = scalar_select %p25, %s27, %s18
      %p29 = scmp.ge.s32.totalorder %s28, 2
      %s30 = scalar_select %p29, 0, %s28
      %s32 = sadd.s32 %s31, 1
      %p35 = scmp.eq.s32.totalorder %s11, 1
      %p36 = scmp.ne.s32.totalorder %s31, %s33
      %p37 = scmp.eq.s32.totalorder %s11, 0
      %p38 = por %p36, %p37
      %p39 = scmp.ne.s32.totalorder %s31, %s33
      %p40 = scmp.eq.s32.totalorder %s16, 1
      %p41 = por %p39, %p40
      %p42 = scmp.ne.s32.totalorder %s33, %s34
      %p43 = scmp.eq.s32.totalorder %s16, 0
      %p44 = por %p42, %p43
      %p45 = scmp.ne.s32.totalorder %s33, %s34
      %p46 = scmp.eq.s32.totalorder %s17, 1
      %p47 = por %p45, %p46
      %p49 = scmp.ne.s32.totalorder %s34, %s48
      %p50 = scmp.eq.s32.totalorder %s17, 0
      %p51 = por %p49, %p50
      %s52 = ssub.s32 %s18, %s30
      %s53 = ssub.s32 %s19, %s26
      %s54 = sor.u32 %s52, %s53
      %p55 = scmp.eq.s32.totalorder %s54, 0
      %s57 = sadd.s32 %s56, 1
      %s58 = scalar_select %p55, %s56, %s57
      %p61 = pneg %p55
      %p62 = scmp.eq.s32.totalorder %s11, 1
      %p63 = por %p61, %p62
      %p64 = scmp.ne.s32.totalorder %s56, %s59
      %p65 = scmp.eq.s32.totalorder %s11, 0
      %p66 = por %p64, %p65
      %p67 = scmp.ne.s32.totalorder %s56, %s59
      %p68 = scmp.eq.s32.totalorder %s16, 1
      %p69 = por %p67, %p68
      %p70 = scmp.ne.s32.totalorder %s59, %s60
      %p71 = scmp.eq.s32.totalorder %s16, 0
      %p72 = por %p70, %p71
      %p73 = scmp.ne.s32.totalorder %s59, %s60
      %p74 = scmp.eq.s32.totalorder %s17, 1
      %p75 = por %p73, %p74
      %p77 = scmp.ne.s32.totalorder %s60, %s76
      %p78 = scmp.eq.s32.totalorder %s17, 0
      %p79 = por %p77, %p78
      %s80 = ssub.s32 %s18, %s30
      %s81 = ssub.s32 %s19, %s26
      %s82 = sor.u32 %s80, %s81
      %p83 = scmp.eq.s32.totalorder %s82, 0
      %s85 = sadd.s32 %s84, 1
      %s86 = scalar_select %p83, %s84, %s85
      %p89 = pneg %p83
      %p90 = scmp.eq.s32.totalorder %s11, 1
      %p91 = por %p89, %p90
      %p92 = scmp.ne.s32.totalorder %s84, %s87
      %p93 = scmp.eq.s32.totalorder %s11, 0
      %p94 = por %p92, %p93
      %p95 = scmp.ne.s32.totalorder %s84, %s87
      %p96 = scmp.eq.s32.totalorder %s16, 1
      %p97 = por %p95, %p96
      %p98 = scmp.ne.s32.totalorder %s87, %s88
      %p99 = scmp.eq.s32.totalorder %s16, 0
      %p100 = por %p98, %p99
      %p101 = scmp.ne.s32.totalorder %s87, %s88
      %p102 = scmp.eq.s32.totalorder %s17, 1
      %p103 = por %p101, %p102
      %p105 = scmp.ne.s32.totalorder %s88, %s104
      %p106 = scmp.eq.s32.totalorder %s17, 0
      %p107 = por %p105, %p106
      %s108 = ssub.s32 %s18, %s30
      %s109 = ssub.s32 %s19, %s26
      %s110 = sor.u32 %s108, %s109
      %p111 = scmp.eq.s32.totalorder %s110, 0
      %s113 = sadd.s32 %s112, 1
      %s114 = scalar_select %p111, %s112, %s113
      %p117 = pneg %p111
      %p118 = scmp.eq.s32.totalorder %s11, 1
      %p119 = por %p117, %p118
      %p120 = scmp.ne.s32.totalorder %s112, %s115
      %p121 = scmp.eq.s32.totalorder %s11, 0
      %p122 = por %p120, %p121
      %p123 = scmp.ne.s32.totalorder %s112, %s115
      %p124 = scmp.eq.s32.totalorder %s16, 1
      %p125 = por %p123, %p124
      %p126 = scmp.ne.s32.totalorder %s115, %s116
      %p127 = scmp.eq.s32.totalorder %s16, 0
      %p128 = por %p126, %p127
      %p129 = scmp.ne.s32.totalorder %s115, %s116
      %p130 = scmp.eq.s32.totalorder %s17, 1
      %p131 = por %p129, %p130
      %p133 = scmp.ne.s32.totalorder %s116, %s132
      %p134 = scmp.eq.s32.totalorder %s17, 0
      %p135 = por %p133, %p134
      %p136 = scmp.le.s32.totalorder 1, %s11
      %p137 = scmp.lt.s32.totalorder %s11, 3
      %p138 = pnand %p136, %p137
      %p139 = pneg %p138
      // Predicated region
      $region9: #{_forward_impl.1} parent=5 // pred_check
        _
      $region10: #{_forward_impl.1} parent=5 // pred_check_branch
        %141 = sbr.rel (%p138) target = $region12
      $region11: #{_forward_impl.1} parent=5 // pred_region
        %s142 = ssub.s32 %s11, 1
        // Predicated region
        $region13: #{_forward_impl.1} parent=11 // pred_check
          %p143 = pneg %p44
        $region14: #{_forward_impl.1} parent=11 // pred_check_branch
          %145 = sbr.rel (%p143) target = $region16
        $region15: #{_forward_impl.1} parent=11 // pred_region
          %s147 = ssub.s32 128, 128
          %148 = vsyncadd [#allocation3], %s147
          %s150 = sshll.u32 %s0, 4
          %s151 = int_to_ptr.vmem [resolvable:$true] %s150
          %153 = dma.vmem_to_smem %s151, 128, [#allocation2], [#allocation3]
        $region16: #{_forward_impl.1} parent=11 // pred_fallthru
          _
      $region12: #{_forward_impl.1} parent=5 // pred_fallthru
        _
      %p154 = scmp.lt.s32.totalorder %s11, 2
      // Predicated region
      $region17: #{_forward_impl.1} parent=5 // pred_check
        %p155 = pneg %p154
      $region18: #{_forward_impl.1} parent=5 // pred_check_branch
        %157 = sbr.rel (%p155) target = $region20
      $region19: #{_forward_impl.1} parent=5 // pred_region
        // Predicated region
        $region21: #{_forward_impl.1} parent=19 // pred_check
          %p158 = pneg %p66
        $region22: #{_forward_impl.1} parent=19 // pred_check_branch
          %160 = sbr.rel (%p158) target = $region24
        $region23: #{_forward_impl.1} parent=19 // pred_region
          %p161 = scmp.lt.s32.totalorder %s18, 1
          %s162 = scalar_select %p161, %s18, 1
          %p163 = scmp.lt.s32.totalorder %s19, 0
          %s164 = scalar_select %p163, %s19, 0
          %s165 = smul.addr %s162, 3
          %s166 = sadd.s32 %s164, %s165
          %s167 = smul.addr %s166, 2
          %s168 = scalar_lea.vmem %s1, %s167
        $region24: #{_forward_impl.1} parent=19 // pred_fallthru
          _
      $region20: #{_forward_impl.1} parent=5 // pred_fallthru
        _
      %p169 = scmp.le.s32.totalorder 1, %s11
      %p170 = scmp.lt.s32.totalorder %s11, 3
      %p171 = pnand %p169, %p170
      %p172 = pneg %p171
      // Predicated region
      $region25: #{_forward_impl.1} parent=5 // pred_check
        _
      $region26: #{_forward_impl.1} parent=5 // pred_check_branch
        %174 = sbr.rel (%p171) target = $region28
      $region27: #{_forward_impl.1} parent=5 // pred_region
        %s175 = ssub.s32 %s11, 1
        // Predicated region
        $region29: #{_forward_impl.1} parent=27 // pred_check
          %p176 = pneg %p44
        $region30: #{_forward_impl.1} parent=27 // pred_check_branch
          %178 = sbr.rel (%p176) target = $region32
        $region31: #{_forward_impl.1} parent=27 // pred_region
          %179 = dma.done [#allocation3], 128
        $region32: #{_forward_impl.1} parent=27 // pred_fallthru
          _
        %180 = sfence
        %p181 = pneg %p44
        %p182 = pneg %p41
        %p183 = scmp.lt.s32.totalorder %s20, 1
        %s184 = scalar_select %p183, %s20, 1
        %p185 = scmp.lt.s32.totalorder %s21, 0
        %s186 = scalar_select %p185, %s21, 0
        %s187 = smul.addr %s184, 3
        %s188 = sadd.s32 %s186, %s187
        %s189 = smul.addr %s188, 2
        %s190 = scalar_lea.vmem %s1, %s189
        %p191 = pneg %p72
        %p192 = pneg %p69
        %p193 = pneg %p100
        %p194 = pneg %p97
        %p195 = scmp.lt.s32.totalorder %s20, 1
        %s196 = scalar_select %p195, %s20, 1
        %p197 = scmp.lt.s32.totalorder %s21, 0
        %s198 = scalar_select %p197, %s21, 0
        %s199 = smul.addr %s196, 16
        %s200 = sadd.s32 %s198, %s199
        %s201 = smul.addr %s200, 2
        %s202 = scalar_lea.vmem %s2, %s201
        %p203 = pneg %p128
        %p204 = pneg %p125
        %p205 = scmp.lt.s32.totalorder %s20, 1
        %s206 = scalar_select %p205, %s20, 1
        %p207 = scmp.lt.s32.totalorder %s21, 0
        %s208 = scalar_select %p207, %s21, 0
        %s209 = smul.addr %s206, 8
        %s210 = sadd.s32 %s208, %s209
        %s211 = smul.addr %s210, 2
        %s212 = scalar_lea.vmem %s3, %s211
        %p213 = scmp.lt.s32.totalorder %s20, 1
        %s214 = scalar_select %p213, %s20, 1
        %p215 = scmp.lt.s32.totalorder %s21, 0
        %s216 = scalar_select %p215, %s21, 0
        %s217 = smul.addr %s214, 3
        %s218 = sadd.s32 %s216, %s217
        %s219 = smul.addr %s218, 2
        %s220 = scalar_lea.vmem %s1, %s219
        %p221 = scmp.lt.s32.totalorder %s20, 1
        %s222 = scalar_select %p221, %s20, 1
        %p223 = scmp.lt.s32.totalorder %s21, 0
        %s224 = scalar_select %p223, %s21, 0
        %s225 = smul.addr %s222, 16
        %s226 = sadd.s32 %s224, %s225
        %s227 = smul.addr %s226, 2
        %s228 = scalar_lea.vmem %s2, %s227
        %p229 = scmp.lt.s32.totalorder %s20, 1
        %s230 = scalar_select %p229, %s20, 1
        %p231 = scmp.lt.s32.totalorder %s21, 0
        %s232 = scalar_select %p231, %s21, 0
        %s233 = smul.addr %s230, 8
        %s234 = sadd.s32 %s232, %s233
        %s235 = smul.addr %s234, 2
        %s236 = scalar_lea.vmem %s3, %s235
        %v237 = vld [vmem:[%s220] sm:$0x3]
        %s238 = scalar_lea.vmem %s220, 2
        %v239 = vld [vmem:[%s238] sm:$0x3]
        %s240 = scalar_lea.vmem %s220, 4
        %v241 = vld [vmem:[%s240] sm:$0x3]
        %s242 = sld [smem:[#allocation2]]
        %s243 = sld [smem:[#allocation2 + $0x1]]
        %s244 = sld [smem:[#allocation2 + $0x2]]
        %s245 = sld [smem:[#allocation2 + $0x3]]
        %s246 = sld [smem:[#allocation2 + $0x4]]
        %s247 = sld [smem:[#allocation2 + $0x5]]
        %s248 = sld [smem:[#allocation2 + $0x6]]
        %s249 = sld [smem:[#allocation2 + $0x7]]
        %s250 = sld [smem:[#allocation2 + $0x8]]
        %s251 = sld [smem:[#allocation2 + $0x9]]
        %s252 = sld [smem:[#allocation2 + $0xa]]
        %s253 = sld [smem:[#allocation2 + $0xb]]
        %s254 = sld [smem:[#allocation2 + $0xc]]
        %s255 = sld [smem:[#allocation2 + $0xd]]
        %s256 = sld [smem:[#allocation2 + $0xe]]
        %s257 = sld [smem:[#allocation2 + $0xf]]
        %v258 = vstv %s242
        %v259 = vmul.f32 %v258, %v237
        %v260 = vstv %s243
        %v261 = vmul.f32 %v260, %v239
        %v262 = vadd.f32 %v259, %v261
        %v263 = vstv %s244
        %v264 = vmul.f32 %v263, %v241
        %v265 = vadd.f32 %v262, %v264
        %v266 = vstv %s251
        %v267 = vsub.f32 %v265, %v266
        %v268 = vstv %s245
        %v269 = vmul.f32 %v268, %v237
        %v270 = vstv %s246
        %v271 = vmul.f32 %v270, %v239
        %v272 = vadd.f32 %v269, %v271
        %v273 = vstv %s247
        %v274 = vmul.f32 %v273, %v241
        %v275 = vadd.f32 %v272, %v274
        %v276 = vstv %s252
        %v277 = vsub.f32 %v275, %v276
        %v278 = vstv %s248
        %v279 = vmul.f32 %v278, %v237
        %v280 = vstv %s249
        %v281 = vmul.f32 %v280, %v239
        %v282 = vadd.f32 %v279, %v281
        %v283 = vstv %s250
        %v284 = vmul.f32 %v283, %v241
        %v285 = vadd.f32 %v282, %v284
        %v286 = vstv %s253
        %v287 = vsub.f32 %v285, %v286
        %v288 = vmax.f32 %v287, 1e-05
        %v289 = vrcp.pop %v288
        %v290 = vmul.f32 %v267, %v289
        %v291 = vstv %s254
        %v292 = vmul.f32 %v291, %v290
        %v293 = vstv %s256
        %v294 = vadd.f32 %v292, %v293
        %295 = vst [vmem:[%s228] sm:$0x3] %v294
        %v296 = vmul.f32 %v277, %v289
        %v297 = vstv %s255
        %v298 = vmul.f32 %v297, %v296
        %v299 = vstv %s257
        %v300 = vadd.f32 %v298, %v299
        %s301 = scalar_lea.vmem %s228, 2
        %302 = vst [vmem:[%s301] sm:$0x3] %v300
        %303 = vst [vmem:[%s236] sm:$0x3] %v288
        %s304 = sld [smem:[#allocation2 + $0x80]]
        %s305 = sld [smem:[#allocation2 + $0x81]]
        %s306 = sld [smem:[#allocation2 + $0x82]]
        %s307 = sld [smem:[#allocation2 + $0x83]]
        %s308 = sld [smem:[#allocation2 + $0x84]]
        %s309 = sld [smem:[#allocation2 + $0x85]]
        %s310 = sld [smem:[#allocation2 + $0x86]]
        %s311 = sld [smem:[#allocation2 + $0x87]]
        %s312 = sld [smem:[#allocation2 + $0x88]]
        %s313 = sld [smem:[#allocation2 + $0x89]]
        %s314 = sld [smem:[#allocation2 + $0x8a]]
        %s315 = sld [smem:[#allocation2 + $0x8b]]
        %s316 = sld [smem:[#allocation2 + $0x8c]]
        %s317 = sld [smem:[#allocation2 + $0x8d]]
        %s318 = sld [smem:[#allocation2 + $0x8e]]
        %s319 = sld [smem:[#allocation2 + $0x8f]]
        %v320 = vstv %s304
        %v321 = vmul.f32 %v320, %v237
        %v322 = vstv %s305
        %v323 = vmul.f32 %v322, %v239
        %v324 = vadd.f32 %v321, %v323
        %v325 = vstv %s306
        %v326 = vmul.f32 %v325, %v241
        %v327 = vadd.f32 %v324, %v326
        %v328 = vstv %s313
        %v329 = vsub.f32 %v327, %v328
        %v330 = vstv %s307
        %v331 = vmul.f32 %v330, %v237
        %v332 = vstv %s308
        %v333 = vmul.f32 %v332, %v239
        %v334 = vadd.f32 %v331, %v333
        %v335 = vstv %s309
        %v336 = vmul.f32 %v335, %v241
        %v337 = vadd.f32 %v334, %v336
        %v338 = vstv %s314
        %v339 = vsub.f32 %v337, %v338
        %v340 = vstv %s310
        %v341 = vmul.f32 %v340, %v237
        %v342 = vstv %s311
        %v343 = vmul.f32 %v342, %v239
        %v344 = vadd.f32 %v341, %v343
        %v345 = vstv %s312
        %v346 = vmul.f32 %v345, %v241
        %v347 = vadd.f32 %v344, %v346
        %v348 = vstv %s315
        %v349 = vsub.f32 %v347, %v348
        %v350 = vmax.f32 %v349, 1e-05
        %v351 = vrcp.pop %v350
        %v352 = vmul.f32 %v329, %v351
        %v353 = vstv %s316
        %v354 = vmul.f32 %v353, %v352
        %v355 = vstv %s318
        %v356 = vadd.f32 %v354, %v355
        %s357 = scalar_lea.vmem %s228, 4
        %358 = vst [vmem:[%s357] sm:$0x3] %v356
        %v359 = vmul.f32 %v339, %v351
        %v360 = vstv %s317
        %v361 = vmul.f32 %v360, %v359
        %v362 = vstv %s319
        %v363 = vadd.f32 %v361, %v362
        %s364 = scalar_lea.vmem %s228, 6
        %365 = vst [vmem:[%s364] sm:$0x3] %v363
        %s366 = scalar_lea.vmem %s236, 2
        %367 = vst [vmem:[%s366] sm:$0x3] %v350
        %s368 = sld [smem:[#allocation2 + $0x100]]
        %s369 = sld [smem:[#allocation2 + $0x101]]
        %s370 = sld [smem:[#allocation2 + $0x102]]
        %s371 = sld [smem:[#allocation2 + $0x103]]
        %s372 = sld [smem:[#allocation2 + $0x104]]
        %s373 = sld [smem:[#allocation2 + $0x105]]
        %s374 = sld [smem:[#allocation2 + $0x106]]
        %s375 = sld [smem:[#allocation2 + $0x107]]
        %s376 = sld [smem:[#allocation2 + $0x108]]
        %s377 = sld [smem:[#allocation2 + $0x109]]
        %s378 = sld [smem:[#allocation2 + $0x10a]]
        %s379 = sld [smem:[#allocation2 + $0x10b]]
        %s380 = sld [smem:[#allocation2 + $0x10c]]
        %s381 = sld [smem:[#allocation2 + $0x10d]]
        %s382 = sld [smem:[#allocation2 + $0x10e]]
        %s383 = sld [smem:[#allocation2 + $0x10f]]
        %v384 = vstv %s368
        %v385 = vmul.f32 %v384, %v237
        %v386 = vstv %s369
        %v387 = vmul.f32 %v386, %v239
        %v388 = vadd.f32 %v385, %v387
        %v389 = vstv %s370
        %v390 = vmul.f32 %v389, %v241
        %v391 = vadd.f32 %v388, %v390
        %v392 = vstv %s377
        %v393 = vsub.f32 %v391, %v392
        %v394 = vstv %s371
        %v395 = vmul.f32 %v394, %v237
        %v396 = vstv %s372
        %v397 = vmul.f32 %v396, %v239
        %v398 = vadd.f32 %v395, %v397
        %v399 = vstv %s373
        %v400 = vmul.f32 %v399, %v241
        %v401 = vadd.f32 %v398, %v400
        %v402 = vstv %s378
        %v403 = vsub.f32 %v401, %v402
        %v404 = vstv %s374
        %v405 = vmul.f32 %v404, %v237
        %v406 = vstv %s375
        %v407 = vmul.f32 %v406, %v239
        %v408 = vadd.f32 %v405, %v407
        %v409 = vstv %s376
        %v410 = vmul.f32 %v409, %v241
        %v411 = vadd.f32 %v408, %v410
        %v412 = vstv %s379
        %v413 = vsub.f32 %v411, %v412
        %v414 = vmax.f32 %v413, 1e-05
        %v415 = vrcp.pop %v414
        %v416 = vmul.f32 %v393, %v415
        %v417 = vstv %s380
        %v418 = vmul.f32 %v417, %v416
        %v419 = vstv %s382
        %v420 = vadd.f32 %v418, %v419
        %s421 = scalar_lea.vmem %s228, 8
        %422 = vst [vmem:[%s421] sm:$0x3] %v420
        %v423 = vmul.f32 %v403, %v415
        %v424 = vstv %s381
        %v425 = vmul.f32 %v424, %v423
        %v426 = vstv %s383
        %v427 = vadd.f32 %v425, %v426
        %s428 = scalar_lea.vmem %s228, 10
        %429 = vst [vmem:[%s428] sm:$0x3] %v427
        %s430 = scalar_lea.vmem %s236, 4
        %431 = vst [vmem:[%s430] sm:$0x3] %v414
        %s432 = sld [smem:[#allocation2 + $0x180]]
        %s433 = sld [smem:[#allocation2 + $0x181]]
        %s434 = sld [smem:[#allocation2 + $0x182]]
        %s435 = sld [smem:[#allocation2 + $0x183]]
        %s436 = sld [smem:[#allocation2 + $0x184]]
        %s437 = sld [smem:[#allocation2 + $0x185]]
        %s438 = sld [smem:[#allocation2 + $0x186]]
        %s439 = sld [smem:[#allocation2 + $0x187]]
        %s440 = sld [smem:[#allocation2 + $0x188]]
        %s441 = sld [smem:[#allocation2 + $0x189]]
        %s442 = sld [smem:[#allocation2 + $0x18a]]
        %s443 = sld [smem:[#allocation2 + $0x18b]]
        %s444 = sld [smem:[#allocation2 + $0x18c]]
        %s445 = sld [smem:[#allocation2 + $0x18d]]
        %s446 = sld [smem:[#allocation2 + $0x18e]]
        %s447 = sld [smem:[#allocation2 + $0x18f]]
        %v448 = vstv %s432
        %v449 = vmul.f32 %v448, %v237
        %v450 = vstv %s433
        %v451 = vmul.f32 %v450, %v239
        %v452 = vadd.f32 %v449, %v451
        %v453 = vstv %s434
        %v454 = vmul.f32 %v453, %v241
        %v455 = vadd.f32 %v452, %v454
        %v456 = vstv %s441
        %v457 = vsub.f32 %v455, %v456
        %v458 = vstv %s435
        %v459 = vmul.f32 %v458, %v237
        %v460 = vstv %s436
        %v461 = vmul.f32 %v460, %v239
        %v462 = vadd.f32 %v459, %v461
        %v463 = vstv %s437
        %v464 = vmul.f32 %v463, %v241
        %v465 = vadd.f32 %v462, %v464
        %v466 = vstv %s442
        %v467 = vsub.f32 %v465, %v466
        %v468 = vstv %s438
        %v469 = vmul.f32 %v468, %v237
        %v470 = vstv %s439
        %v471 = vmul.f32 %v470, %v239
        %v472 = vadd.f32 %v469, %v471
        %v473 = vstv %s440
        %v474 = vmul.f32 %v473, %v241
        %v475 = vadd.f32 %v472, %v474
        %v476 = vstv %s443
        %v477 = vsub.f32 %v475, %v476
        %v478 = vmax.f32 %v477, 1e-05
        %v479 = vrcp.pop %v478
        %v480 = vmul.f32 %v457, %v479
        %v481 = vstv %s444
        %v482 = vmul.f32 %v481, %v480
        %v483 = vstv %s446
        %v484 = vadd.f32 %v482, %v483
        %s485 = scalar_lea.vmem %s228, 12
        %486 = vst [vmem:[%s485] sm:$0x3] %v484
        %v487 = vmul.f32 %v467, %v479
        %v488 = vstv %s445
        %v489 = vmul.f32 %v488, %v487
        %v490 = vstv %s447
        %v491 = vadd.f32 %v489, %v490
        %s492 = scalar_lea.vmem %s228, 14
        %493 = vst [vmem:[%s492] sm:$0x3] %v491
        %s494 = scalar_lea.vmem %s236, 6
        %495 = vst [vmem:[%s494] sm:$0x3] %v478
        %s496 = sld [smem:[#allocation2 + $0x200]]
        %s497 = sld [smem:[#allocation2 + $0x201]]
        %s498 = sld [smem:[#allocation2 + $0x202]]
        %s499 = sld [smem:[#allocation2 + $0x203]]
        %s500 = sld [smem:[#allocation2 + $0x204]]
        %s501 = sld [smem:[#allocation2 + $0x205]]
        %s502 = sld [smem:[#allocation2 + $0x206]]
        %s503 = sld [smem:[#allocation2 + $0x207]]
        %s504 = sld [smem:[#allocation2 + $0x208]]
        %s505 = sld [smem:[#allocation2 + $0x209]]
        %s506 = sld [smem:[#allocation2 + $0x20a]]
        %s507 = sld [smem:[#allocation2 + $0x20b]]
        %s508 = sld [smem:[#allocation2 + $0x20c]]
        %s509 = sld [smem:[#allocation2 + $0x20d]]
        %s510 = sld [smem:[#allocation2 + $0x20e]]
        %s511 = sld [smem:[#allocation2 + $0x20f]]
        %v512 = vstv %s496
        %v513 = vmul.f32 %v512, %v237
        %v514 = vstv %s497
        %v515 = vmul.f32 %v514, %v239
        %v516 = vadd.f32 %v513, %v515
        %v517 = vstv %s498
        %v518 = vmul.f32 %v517, %v241
        %v519 = vadd.f32 %v516, %v518
        %v520 = vstv %s505
        %v521 = vsub.f32 %v519, %v520
        %v522 = vstv %s499
        %v523 = vmul.f32 %v522, %v237
        %v524 = vstv %s500
        %v525 = vmul.f32 %v524, %v239
        %v526 = vadd.f32 %v523, %v525
        %v527 = vstv %s501
        %v528 = vmul.f32 %v527, %v241
        %v529 = vadd.f32 %v526, %v528
        %v530 = vstv %s506
        %v531 = vsub.f32 %v529, %v530
        %v532 = vstv %s502
        %v533 = vmul.f32 %v532, %v237
        %v534 = vstv %s503
        %v535 = vmul.f32 %v534, %v239
        %v536 = vadd.f32 %v533, %v535
        %v537 = vstv %s504
        %v538 = vmul.f32 %v537, %v241
        %v539 = vadd.f32 %v536, %v538
        %v540 = vstv %s507
        %v541 = vsub.f32 %v539, %v540
        %v542 = vmax.f32 %v541, 1e-05
        %v543 = vrcp.pop %v542
        %v544 = vmul.f32 %v521, %v543
        %v545 = vstv %s508
        %v546 = vmul.f32 %v545, %v544
        %v547 = vstv %s510
        %v548 = vadd.f32 %v546, %v547
        %s549 = scalar_lea.vmem %s228, 16
        %550 = vst [vmem:[%s549] sm:$0x3] %v548
        %v551 = vmul.f32 %v531, %v543
        %v552 = vstv %s509
        %v553 = vmul.f32 %v552, %v551
        %v554 = vstv %s511
        %v555 = vadd.f32 %v553, %v554
        %s556 = scalar_lea.vmem %s228, 18
        %557 = vst [vmem:[%s556] sm:$0x3] %v555
        %s558 = scalar_lea.vmem %s236, 8
        %559 = vst [vmem:[%s558] sm:$0x3] %v542
        %s560 = sld [smem:[#allocation2 + $0x280]]
        %s561 = sld [smem:[#allocation2 + $0x281]]
        %s562 = sld [smem:[#allocation2 + $0x282]]
        %s563 = sld [smem:[#allocation2 + $0x283]]
        %s564 = sld [smem:[#allocation2 + $0x284]]
        %s565 = sld [smem:[#allocation2 + $0x285]]
        %s566 = sld [smem:[#allocation2 + $0x286]]
        %s567 = sld [smem:[#allocation2 + $0x287]]
        %s568 = sld [smem:[#allocation2 + $0x288]]
        %s569 = sld [smem:[#allocation2 + $0x289]]
        %s570 = sld [smem:[#allocation2 + $0x28a]]
        %s571 = sld [smem:[#allocation2 + $0x28b]]
        %s572 = sld [smem:[#allocation2 + $0x28c]]
        %s573 = sld [smem:[#allocation2 + $0x28d]]
        %s574 = sld [smem:[#allocation2 + $0x28e]]
        %s575 = sld [smem:[#allocation2 + $0x28f]]
        %v576 = vstv %s560
        %v577 = vmul.f32 %v576, %v237
        %v578 = vstv %s561
        %v579 = vmul.f32 %v578, %v239
        %v580 = vadd.f32 %v577, %v579
        %v581 = vstv %s562
        %v582 = vmul.f32 %v581, %v241
        %v583 = vadd.f32 %v580, %v582
        %v584 = vstv %s569
        %v585 = vsub.f32 %v583, %v584
        %v586 = vstv %s563
        %v587 = vmul.f32 %v586, %v237
        %v588 = vstv %s564
        %v589 = vmul.f32 %v588, %v239
        %v590 = vadd.f32 %v587, %v589
        %v591 = vstv %s565
        %v592 = vmul.f32 %v591, %v241
        %v593 = vadd.f32 %v590, %v592
        %v594 = vstv %s570
        %v595 = vsub.f32 %v593, %v594
        %v596 = vstv %s566
        %v597 = vmul.f32 %v596, %v237
        %v598 = vstv %s567
        %v599 = vmul.f32 %v598, %v239
        %v600 = vadd.f32 %v597, %v599
        %v601 = vstv %s568
        %v602 = vmul.f32 %v601, %v241
        %v603 = vadd.f32 %v600, %v602
        %v604 = vstv %s571
        %v605 = vsub.f32 %v603, %v604
        %v606 = vmax.f32 %v605, 1e-05
        %v607 = vrcp.pop %v606
        %v608 = vmul.f32 %v585, %v607
        %v609 = vstv %s572
        %v610 = vmul.f32 %v609, %v608
        %v611 = vstv %s574
        %v612 = vadd.f32 %v610, %v611
        %s613 = scalar_lea.vmem %s228, 20
        %614 = vst [vmem:[%s613] sm:$0x3] %v612
        %v615 = vmul.f32 %v595, %v607
        %v616 = vstv %s573
        %v617 = vmul.f32 %v616, %v615
        %v618 = vstv %s575
        %v619 = vadd.f32 %v617, %v618
        %s620 = scalar_lea.vmem %s228, 22
        %621 = vst [vmem:[%s620] sm:$0x3] %v619
        %s622 = scalar_lea.vmem %s236, 10
        %623 = vst [vmem:[%s622] sm:$0x3] %v606
        %s624 = sld [smem:[#allocation2 + $0x300]]
        %s625 = sld [smem:[#allocation2 + $0x301]]
        %s626 = sld [smem:[#allocation2 + $0x302]]
        %s627 = sld [smem:[#allocation2 + $0x303]]
        %s628 = sld [smem:[#allocation2 + $0x304]]
        %s629 = sld [smem:[#allocation2 + $0x305]]
        %s630 = sld [smem:[#allocation2 + $0x306]]
        %s631 = sld [smem:[#allocation2 + $0x307]]
        %s632 = sld [smem:[#allocation2 + $0x308]]
        %s633 = sld [smem:[#allocation2 + $0x309]]
        %s634 = sld [smem:[#allocation2 + $0x30a]]
        %s635 = sld [smem:[#allocation2 + $0x30b]]
        %s636 = sld [smem:[#allocation2 + $0x30c]]
        %s637 = sld [smem:[#allocation2 + $0x30d]]
        %s638 = sld [smem:[#allocation2 + $0x30e]]
        %s639 = sld [smem:[#allocation2 + $0x30f]]
        %v640 = vstv %s624
        %v641 = vmul.f32 %v640, %v237
        %v642 = vstv %s625
        %v643 = vmul.f32 %v642, %v239
        %v644 = vadd.f32 %v641, %v643
        %v645 = vstv %s626
        %v646 = vmul.f32 %v645, %v241
        %v647 = vadd.f32 %v644, %v646
        %v648 = vstv %s633
        %v649 = vsub.f32 %v647, %v648
        %v650 = vstv %s627
        %v651 = vmul.f32 %v650, %v237
        %v652 = vstv %s628
        %v653 = vmul.f32 %v652, %v239
        %v654 = vadd.f32 %v651, %v653
        %v655 = vstv %s629
        %v656 = vmul.f32 %v655, %v241
        %v657 = vadd.f32 %v654, %v656
        %v658 = vstv %s634
        %v659 = vsub.f32 %v657, %v658
        %v660 = vstv %s630
        %v661 = vmul.f32 %v660, %v237
        %v662 = vstv %s631
        %v663 = vmul.f32 %v662, %v239
        %v664 = vadd.f32 %v661, %v663
        %v665 = vstv %s632
        %v666 = vmul.f32 %v665, %v241
        %v667 = vadd.f32 %v664, %v666
        %v668 = vstv %s635
        %v669 = vsub.f32 %v667, %v668
        %v670 = vmax.f32 %v669, 1e-05
        %v671 = vrcp.pop %v670
        %v672 = vmul.f32 %v649, %v671
        %v673 = vstv %s636
        %v674 = vmul.f32 %v673, %v672
        %v675 = vstv %s638
        %v676 = vadd.f32 %v674, %v675
        %s677 = scalar_lea.vmem %s228, 24
        %678 = vst [vmem:[%s677] sm:$0x3] %v676
        %v679 = vmul.f32 %v659, %v671
        %v680 = vstv %s637
        %v681 = vmul.f32 %v680, %v679
        %v682 = vstv %s639
        %v683 = vadd.f32 %v681, %v682
        %s684 = scalar_lea.vmem %s228, 26
        %685 = vst [vmem:[%s684] sm:$0x3] %v683
        %s686 = scalar_lea.vmem %s236, 12
        %687 = vst [vmem:[%s686] sm:$0x3] %v670
        %s688 = sld [smem:[#allocation2 + $0x380]]
        %s689 = sld [smem:[#allocation2 + $0x381]]
        %s690 = sld [smem:[#allocation2 + $0x382]]
        %s691 = sld [smem:[#allocation2 + $0x383]]
        %s692 = sld [smem:[#allocation2 + $0x384]]
        %s693 = sld [smem:[#allocation2 + $0x385]]
        %s694 = sld [smem:[#allocation2 + $0x386]]
        %s695 = sld [smem:[#allocation2 + $0x387]]
        %s696 = sld [smem:[#allocation2 + $0x388]]
        %s697 = sld [smem:[#allocation2 + $0x389]]
        %s698 = sld [smem:[#allocation2 + $0x38a]]
        %s699 = sld [smem:[#allocation2 + $0x38b]]
        %s700 = sld [smem:[#allocation2 + $0x38c]]
        %s701 = sld [smem:[#allocation2 + $0x38d]]
        %s702 = sld [smem:[#allocation2 + $0x38e]]
        %s703 = sld [smem:[#allocation2 + $0x38f]]
        %v704 = vstv %s688
        %v705 = vmul.f32 %v704, %v237
        %v706 = vstv %s689
        %v707 = vmul.f32 %v706, %v239
        %v708 = vadd.f32 %v705, %v707
        %v709 = vstv %s690
        %v710 = vmul.f32 %v709, %v241
        %v711 = vadd.f32 %v708, %v710
        %v712 = vstv %s697
        %v713 = vsub.f32 %v711, %v712
        %v714 = vstv %s691
        %v715 = vmul.f32 %v714, %v237
        %v716 = vstv %s692
        %v717 = vmul.f32 %v716, %v239
        %v718 = vadd.f32 %v715, %v717
        %v719 = vstv %s693
        %v720 = vmul.f32 %v719, %v241
        %v721 = vadd.f32 %v718, %v720
        %v722 = vstv %s698
        %v723 = vsub.f32 %v721, %v722
        %v724 = vstv %s694
        %v725 = vmul.f32 %v724, %v237
        %v726 = vstv %s695
        %v727 = vmul.f32 %v726, %v239
        %v728 = vadd.f32 %v725, %v727
        %v729 = vstv %s696
        %v730 = vmul.f32 %v729, %v241
        %v731 = vadd.f32 %v728, %v730
        %v732 = vstv %s699
        %v733 = vsub.f32 %v731, %v732
        %v734 = vmax.f32 %v733, 1e-05
        %v735 = vrcp.pop %v734
        %v736 = vmul.f32 %v713, %v735
        %v737 = vstv %s700
        %v738 = vmul.f32 %v737, %v736
        %v739 = vstv %s702
        %v740 = vadd.f32 %v738, %v739
        %s741 = scalar_lea.vmem %s228, 28
        %742 = vst [vmem:[%s741] sm:$0x3] %v740
        %v743 = vmul.f32 %v723, %v735
        %v744 = vstv %s701
        %v745 = vmul.f32 %v744, %v743
        %v746 = vstv %s703
        %v747 = vadd.f32 %v745, %v746
        %s748 = scalar_lea.vmem %s228, 30
        %749 = vst [vmem:[%s748] sm:$0x3] %v747
        %s750 = scalar_lea.vmem %s236, 14
        %751 = vst [vmem:[%s750] sm:$0x3] %v734
        %p752 = scmp.lt.s32.totalorder %s20, 1
        %s753 = scalar_select %p752, %s20, 1
        %p754 = scmp.lt.s32.totalorder %s21, 0
        %s755 = scalar_select %p754, %s21, 0
        %s756 = smul.addr %s753, 16
        %s757 = sadd.s32 %s755, %s756
        %s758 = smul.addr %s757, 2
        %s759 = scalar_lea.vmem %s2, %s758
        %p760 = scmp.lt.s32.totalorder %s20, 1
        %s761 = scalar_select %p760, %s20, 1
        %p762 = scmp.lt.s32.totalorder %s21, 0
        %s763 = scalar_select %p762, %s21, 0
        %s764 = smul.addr %s761, 8
        %s765 = sadd.s32 %s763, %s764
        %s766 = smul.addr %s765, 2
        %s767 = scalar_lea.vmem %s3, %s766
        // Predicated region
        $region33: #{_forward_impl.1} parent=27 // pred_check
          %p768 = pneg %p97
        $region34: #{_forward_impl.1} parent=27 // pred_check_branch
          %770 = sbr.rel (%p768) target = $region36
        $region35: #{_forward_impl.1} parent=27 // pred_region
          _
        $region36: #{_forward_impl.1} parent=27 // pred_fallthru
          _
        // Predicated region
        $region37: #{_forward_impl.1} parent=27 // pred_check
          %p771 = pneg %p125
        $region38: #{_forward_impl.1} parent=27 // pred_check_branch
          %773 = sbr.rel (%p771) target = $region40
        $region39: #{_forward_impl.1} parent=27 // pred_region
          _
        $region40: #{_forward_impl.1} parent=27 // pred_fallthru
          _
      $region28: #{_forward_impl.1} parent=5 // pred_fallthru
        _
      %p774 = scmp.le.s32.totalorder 2, %s11
      // Predicated region
      $region41: #{_forward_impl.1} parent=5 // pred_check
        %p775 = pneg %p774
      $region42: #{_forward_impl.1} parent=5 // pred_check_branch
        %777 = sbr.rel (%p775) target = $region44
      $region43: #{_forward_impl.1} parent=5 // pred_region
        %s778 = ssub.s32 %s11, 2
        // Predicated region
        $region45: #{_forward_impl.1} parent=43 // pred_check
          %p779 = pneg %p103
        $region46: #{_forward_impl.1} parent=43 // pred_check_branch
          %781 = sbr.rel (%p779) target = $region48
        $region47: #{_forward_impl.1} parent=43 // pred_region
          %p782 = scmp.lt.s32.totalorder %s22, 1
          %s783 = scalar_select %p782, %s22, 1
          %p784 = scmp.lt.s32.totalorder %s23, 0
          %s785 = scalar_select %p784, %s23, 0
          %s786 = smul.addr %s783, 16
          %s787 = sadd.s32 %s785, %s786
          %s788 = smul.addr %s787, 2
          %s789 = scalar_lea.vmem %s2, %s788
        $region48: #{_forward_impl.1} parent=43 // pred_fallthru
          _
        // Predicated region
        $region49: #{_forward_impl.1} parent=43 // pred_check
          %p790 = pneg %p131
        $region50: #{_forward_impl.1} parent=43 // pred_check_branch
          %792 = sbr.rel (%p790) target = $region52
        $region51: #{_forward_impl.1} parent=43 // pred_region
          %p793 = scmp.lt.s32.totalorder %s22, 1
          %s794 = scalar_select %p793, %s22, 1
          %p795 = scmp.lt.s32.totalorder %s23, 0
          %s796 = scalar_select %p795, %s23, 0
          %s797 = smul.addr %s794, 8
          %s798 = sadd.s32 %s796, %s797
          %s799 = smul.addr %s798, 2
          %s800 = scalar_lea.vmem %s3, %s799
        $region52: #{_forward_impl.1} parent=43 // pred_fallthru
          _
      $region44: #{_forward_impl.1} parent=5 // pred_fallthru
        _
    $region6: #{_forward_impl.1} parent=1 // loop_footer
      %s15 = sadd.s32 1, %s11
    $region7: #{_forward_impl.1} parent=1 // loop_footer_branch
      %10 = sbr.rel target = $region3
    $region8: #{_forward_impl.1} parent=1 // loop_exit
      _
    %801 = vsyncpa [#allocation3], 1
    %s802 = scalar_lea.sflag [#allocation3], 1
    %803 = vsyncpa %s802, 1

</llo_original>
